<compile_context>
chip_gen: v5e
topology: v5e:2x2
jax: 0.10.0
libtpu: 0.0.40
codegen_flags: <defaults>
</compile_context>

<pallas_src>
import numpy as np
import jax
import jax.numpy as jnp
from jax.experimental import pallas as pl
from jax.experimental.pallas import tpu as pltpu

# ----------------------------- configuration --------------------------------
B, S = 2, 8          # batch, sequence length
H = 32               # hidden_dim
N_HEAD = 4
HEAD_DIM = H // N_HEAD
FFN = 64             # feed-forward dim
VOCAB = 50           # input_dim
MAX_LEN = 16
PAD_IDX = 0
N_LAYER = 2
EPS = 1e-6
EMB_SCALE = float(H) ** 0.5
NEG_INF = -1e10
ATTN_SCALE = 1.0 / (float(HEAD_DIM) ** 0.5)

VP = VOCAB + MAX_LEN + 1     # rows of the fused [token | position] embedding table
M = N_HEAD * S               # expanded (head, key) axis used inside attention


# --------------------------- shared kernel helpers ---------------------------
def _layer_norm(x, gamma, beta):
    # LayerNorm over last dim, eps=1e-6 (matches nn.LayerNorm(hidden_dim, eps=1e-6))
    mean = jnp.mean(x, axis=-1, keepdims=True)
    var = jnp.mean(jnp.square(x - mean), axis=-1, keepdims=True)
    return (x - mean) * jax.lax.rsqrt(var + EPS) * gamma + beta


# ------------------------------- fused kernel --------------------------------
def encoder_kernel(tok_ref, pos_ref, nmask_ref, emb_ref, hmask_ref, bones_ref,
                   lng_ref, lnb_ref, wqkv_ref, bqkv_ref, wo_ref, bo_ref,
                   w1_ref, b1_ref, w2_ref, b2_ref, fing_ref, finb_ref,
                   out_ref, x_scr):
    layer = pl.program_id(1)

    # ---- embedding: only on the first layer step of this batch element ----
    @pl.when(layer == 0)
    def _():
        tok = tok_ref[...].reshape(S, 1)                  # (S, 1) int32 token ids
        pos = pos_ref[...].reshape(S, 1) + VOCAB          # (S, 1) int32 offset into table
        cols = jax.lax.broadcasted_iota(jnp.int32, (S, VP), 1)
        # combined one-hot: one row selects the (pre-scaled) token row AND the pos row
        onehot = jnp.logical_or(cols == tok, cols == pos).astype(jnp.float32)
        x_scr[...] = jnp.dot(onehot, emb_ref[...], preferred_element_type=jnp.float32)

    x = x_scr[...]                                        # (S, H) current activation
    gamma = lng_ref[0]                                    # (1, H) layer-shared LN params
    beta = lnb_ref[0]

    # ---- self attention on LayerNorm(x) ----
    xn = _layer_norm(x, gamma, beta)
    qkv = jnp.dot(xn, wqkv_ref[0], preferred_element_type=jnp.float32) + bqkv_ref[0]  # (S, 3H)
    q = qkv[:, :H]
    k = qkv[:, H:2 * H]
    v = qkv[:, 2 * H:]

    # Head handling without per-head loops or lane concat: replicate K/V along an
    # (head, key) axis of length M = N_HEAD*S and zero out channels that do not
    # belong to the head of each row (hmask).  Then:
    #   scores[q, h*S+j]  = <q_row restricted to head h , k[j] head h>
    #   output[q, c]      = sum_j p[q, head(c)*S+j] * v[j, c]   (== concat of heads)
    hmask = hmask_ref[...]                                # (M, H) head-channel selector
    k_exp = jnp.concatenate([k] * N_HEAD, axis=0) * hmask # (M, H)
    v_exp = jnp.concatenate([v] * N_HEAD, axis=0) * hmask # (M, H)

    s = jnp.dot(q, k_exp.T, preferred_element_type=jnp.float32) * ATTN_SCALE   # (S, M)
    s = s + nmask_ref[0]                                  # additive key-pad mask (per head block)
    s = s - jnp.max(s, axis=-1, keepdims=True)            # per-query shift (softmax invariant)
    p = jnp.exp(s)
    # per-head denominators via one matmul with a block-diagonal ones matrix
    denom = jnp.dot(p, bones_ref[...], preferred_element_type=jnp.float32)      # (S, M)
    p = p / denom
    attn = jnp.dot(p, v_exp, preferred_element_type=jnp.float32)                # (S, H)
    attn = jnp.dot(attn, wo_ref[0], preferred_element_type=jnp.float32) + bo_ref[0]
    x_attn = x + attn                                     # residual 1

    # ---- FFN on LayerNorm(x_attn); PyTorch layer reuses the SAME LayerNorm params ----
    yn = _layer_norm(x_attn, gamma, beta)
    hid = jnp.maximum(jnp.dot(yn, w1_ref[0], preferred_element_type=jnp.float32)
                      + b1_ref[0], 0.0)
    x_out = x_attn + (jnp.dot(hid, w2_ref[0], preferred_element_type=jnp.float32)
                      + b2_ref[0])                        # residual 2
    x_scr[...] = x_out

    # ---- final LayerNorm on the last layer step ----
    @pl.when(layer == pl.num_programs(1) - 1)
    def _():
        out_ref[0] = _layer_norm(x_out, fing_ref[...], finb_ref[...])


# ------------------------------ parameters -----------------------------------
def create_position_encoding(max_len_plus_1, hidden_dim):
    # Standard sinusoidal table; row 0 (pad position) zeroed.
    pos = np.arange(max_len_plus_1)[:, None].astype(np.float64)
    i = np.arange(hidden_dim)[None, :].astype(np.float64)
    angle = pos / np.power(10000.0, 2.0 * (i // 2) / hidden_dim)
    tbl = np.zeros((max_len_plus_1, hidden_dim), dtype=np.float64)
    tbl[:, 0::2] = np.sin(angle[:, 0::2])
    tbl[:, 1::2] = np.cos(angle[:, 1::2])
    tbl[0] = 0.0
    return jnp.asarray(tbl, dtype=jnp.float32)


def init_params(key):
    keys = jax.random.split(key, 3 + N_LAYER)
    params = {}
    # nn.init.normal_(token_embedding.weight, std=hidden_dim**-0.5); padding row zeroed
    tok_emb = jax.random.normal(keys[0], (VOCAB, H), jnp.float32) * (H ** -0.5)
    params["tok_emb"] = tok_emb.at[PAD_IDX].set(0.0)
    params["pos_emb"] = create_position_encoding(MAX_LEN + 1, H)
    params["final_ln_g"] = jnp.ones((1, H), jnp.float32)
    params["final_ln_b"] = jnp.zeros((1, H), jnp.float32)
    layers = []
    for l in range(N_LAYER):
        lk = jax.random.split(keys[3 + l], 6)
        std = 0.05
        layers.append(dict(
            ln_g=jnp.ones((1, H), jnp.float32),
            ln_b=jnp.zeros((1, H), jnp.float32),
            wq=jax.random.normal(lk[0], (H, H), jnp.float32) * std, bq=jnp.zeros((1, H), jnp.float32),
            wk=jax.random.normal(lk[1], (H, H), jnp.float32) * std, bk=jnp.zeros((1, H), jnp.float32),
            wv=jax.random.normal(lk[2], (H, H), jnp.float32) * std, bv=jnp.zeros((1, H), jnp.float32),
            wo=jax.random.normal(lk[3], (H, H), jnp.float32) * std, bo=jnp.zeros((1, H), jnp.float32),
            w1=jax.random.normal(lk[4], (H, FFN), jnp.float32) * std, b1=jnp.zeros((1, FFN), jnp.float32),
            w2=jax.random.normal(lk[5], (FFN, H), jnp.float32) * std, b2=jnp.zeros((1, H), jnp.float32),
        ))
    params["layers"] = layers
    return params


# ------------------------------ forward pass ----------------------------------
def encoder_forward(params, source):
    src = source.astype(jnp.int32)
    is_pad = src == PAD_IDX
    maskf = is_pad.astype(jnp.float32)                                   # (B, S)
    pos = jnp.where(is_pad, 0,
                    jnp.arange(1, S + 1, dtype=jnp.int32)[None, :]).astype(jnp.int32)

    # glue / data prep (plain XLA, tiny arrays):
    # additive key-pad mask expanded per head block; fused pre-scaled embedding
    # table; constant head-selection and block-diagonal-ones matrices.
    nmask = (jnp.tile(maskf, (1, N_HEAD)) * NEG_INF).reshape(B, 1, M)
    emb_tbl = jnp.concatenate([params["tok_emb"] * EMB_SCALE, params["pos_emb"]], axis=0)  # (VP, H)
    m_idx = np.arange(M)
    hmask = jnp.asarray((np.arange(H)[None, :] // HEAD_DIM) == (m_idx[:, None] // S),
                        dtype=jnp.float32)                               # (M, H)
    bones = jnp.asarray((m_idx[:, None] // S) == (m_idx[None, :] // S),
                        dtype=jnp.float32)                               # (M, M)

    layers = params["layers"]
    st = lambda name: jnp.stack([lp[name] for lp in layers])             # (N_LAYER, ...)
    wqkv = jnp.stack([jnp.concatenate([lp["wq"], lp["wk"], lp["wv"]], axis=1) for lp in layers])
    bqkv = jnp.stack([jnp.concatenate([lp["bq"], lp["bk"], lp["bv"]], axis=1) for lp in layers])
    lng, lnb = st("ln_g"), st("ln_b")
    wo, bo = st("wo"), st("bo")
    w1, b1 = st("w1"), st("b1")
    w2, b2 = st("w2"), st("b2")

    tok3 = src.reshape(B, 1, S)
    pos3 = pos.reshape(B, 1, S)

    def batch_spec(a):
        nd = a.ndim
        return pl.BlockSpec((1,) + tuple(a.shape[1:]),
                            lambda bi, li, _nd=nd: (bi,) + (0,) * (_nd - 1))

    def layer_spec(a):
        nd = a.ndim
        return pl.BlockSpec((1,) + tuple(a.shape[1:]),
                            lambda bi, li, _nd=nd: (li,) + (0,) * (_nd - 1))

    def const_spec(a):
        nd = a.ndim
        return pl.BlockSpec(tuple(a.shape), lambda bi, li, _nd=nd: (0,) * _nd)

    args = [tok3, pos3, nmask, emb_tbl, hmask, bones,
            lng, lnb, wqkv, bqkv, wo, bo, w1, b1, w2, b2,
            params["final_ln_g"], params["final_ln_b"]]
    in_specs = [batch_spec(tok3), batch_spec(pos3), batch_spec(nmask),
                const_spec(emb_tbl), const_spec(hmask), const_spec(bones),
                layer_spec(lng), layer_spec(lnb),
                layer_spec(wqkv), layer_spec(bqkv), layer_spec(wo), layer_spec(bo),
                layer_spec(w1), layer_spec(b1), layer_spec(w2), layer_spec(b2),
                const_spec(params["final_ln_g"]), const_spec(params["final_ln_b"])]

    # TODO(synk): nn.Dropout is identity here (eval-mode semantics).
    return pl.pallas_call(
        encoder_kernel,
        out_shape=jax.ShapeDtypeStruct((B, S, H), jnp.float32),
        grid_spec=pltpu.PrefetchScalarGridSpec(
            num_scalar_prefetch=0,
            grid=(B, N_LAYER),                     # batch outer (parallel), layers inner
            in_specs=in_specs,
            out_specs=pl.BlockSpec((1, S, H), lambda bi, li: (bi, 0, 0)),
            scratch_shapes=[pltpu.VMEM((S, H), jnp.float32)],
        ),
        compiler_params=pltpu.CompilerParams(
            dimension_semantics=("parallel", "arbitrary")),
    )(*args)


# ---------------------- pure-JAX reference (for checking) ---------------------
def encoder_reference(params, source):
    is_pad = (source == PAD_IDX)
    maskf = is_pad.astype(jnp.float32)
    pos = jnp.where(is_pad, 0, jnp.arange(1, S + 1, dtype=jnp.int32)[None, :])
    x = params["tok_emb"][source] * EMB_SCALE + params["pos_emb"][pos]

    def ln(x, g, b):
        m = jnp.mean(x, -1, keepdims=True)
        v = jnp.mean((x - m) ** 2, -1, keepdims=True)
        return (x - m) / jnp.sqrt(v + EPS) * g + b

    for lp in params["layers"]:
        xn = ln(x, lp["ln_g"], lp["ln_b"])
        q = xn @ lp["wq"] + lp["bq"]
        k = xn @ lp["wk"] + lp["bk"]
        v = xn @ lp["wv"] + lp["bv"]
        q = q.reshape(B, S, N_HEAD, HEAD_DIM).transpose(0, 2, 1, 3)
        k = k.reshape(B, S, N_HEAD, HEAD_DIM).transpose(0, 2, 1, 3)
        v = v.reshape(B, S, N_HEAD, HEAD_DIM).transpose(0, 2, 1, 3)
        s = jnp.einsum('bhqd,bhkd->bhqk', q, k) * ATTN_SCALE
        s = s + maskf[:, None, None, :] * NEG_INF
        p = jax.nn.softmax(s, axis=-1)
        o = jnp.einsum('bhqk,bhkd->bhqd', p, v).transpose(0, 2, 1, 3).reshape(B, S, H)
        x = x + (o @ lp["wo"] + lp["bo"])
        yn = ln(x, lp["ln_g"], lp["ln_b"])
        x = x + (jnp.maximum(yn @ lp["w1"] + lp["b1"], 0.0) @ lp["w2"] + lp["b2"])
    return ln(x, params["final_ln_g"], params["final_ln_b"])


# ----------------------------------- main --------------------------------------
if __name__ == "__main__":
    key = jax.random.PRNGKey(0)
    k_tok, k_par = jax.random.split(key)
    source = jax.random.randint(k_tok, (B, S), 1, VOCAB, dtype=jnp.int32)
    source = source.at[1, 6:].set(PAD_IDX)   # include some padding tokens

    params = init_params(k_par)

    out = encoder_forward(params, source)
    out = jax.block_until_ready(out)
    ref = encoder_reference(params, source)
    np.testing.assert_allclose(np.asarray(out), np.asarray(ref), rtol=1e-4, atol=1e-4)

    print("KERNEL_OK")
</pallas_src>

<mosaic_0001>
module attributes {stable_mosaic.version = 11 : i64} {
  func.func @encoder_kernel(%arg0: i32, %arg1: i32, %arg2: memref<1x1x8xi32, #tpu.memory_space<vmem>>, %arg3: memref<1x1x8xi32, #tpu.memory_space<vmem>>, %arg4: memref<1x1x32xf32, #tpu.memory_space<vmem>>, %arg5: memref<67x32xf32, #tpu.memory_space<vmem>>, %arg6: memref<32x32xf32, #tpu.memory_space<vmem>>, %arg7: memref<32x32xf32, #tpu.memory_space<vmem>>, %arg8: memref<1x1x32xf32, #tpu.memory_space<vmem>>, %arg9: memref<1x1x32xf32, #tpu.memory_space<vmem>>, %arg10: memref<1x32x96xf32, #tpu.memory_space<vmem>>, %arg11: memref<1x1x96xf32, #tpu.memory_space<vmem>>, %arg12: memref<1x32x32xf32, #tpu.memory_space<vmem>>, %arg13: memref<1x1x32xf32, #tpu.memory_space<vmem>>, %arg14: memref<1x32x64xf32, #tpu.memory_space<vmem>>, %arg15: memref<1x1x64xf32, #tpu.memory_space<vmem>>, %arg16: memref<1x64x32xf32, #tpu.memory_space<vmem>>, %arg17: memref<1x1x32xf32, #tpu.memory_space<vmem>>, %arg18: memref<1x32xf32, #tpu.memory_space<vmem>>, %arg19: memref<1x32xf32, #tpu.memory_space<vmem>>, %arg20: memref<1x8x32xf32, #tpu.memory_space<vmem>>, %arg21: memref<8x32xf32, #tpu.memory_space<vmem>>) attributes {dimension_semantics = [#tpu.dimension_semantics<parallel>, #tpu.dimension_semantics<arbitrary>], iteration_bounds = array<i64: 2, 2>, scalar_prefetch = 0 : i64, scratch_operands = 1 : i64, tpu.core_type = #tpu.core_type<tc>, window_params = [{transform_indices = @transform_0, window_bounds = array<i64: 1, 1, 8>}, {transform_indices = @transform_1, window_bounds = array<i64: 1, 1, 8>}, {transform_indices = @transform_2, window_bounds = array<i64: 1, 1, 32>}, {pipeline_mode = #tpu.pipeline_mode<synchronous>, transform_indices = @transform_3, window_bounds = array<i64: 67, 32>}, {pipeline_mode = #tpu.pipeline_mode<synchronous>, transform_indices = @transform_4, window_bounds = array<i64: 32, 32>}, {pipeline_mode = #tpu.pipeline_mode<synchronous>, transform_indices = @transform_5, window_bounds = array<i64: 32, 32>}, {transform_indices = @transform_6, window_bounds = array<i64: 1, 1, 32>}, {transform_indices = @transform_7, window_bounds = array<i64: 1, 1, 32>}, {transform_indices = @transform_8, window_bounds = array<i64: 1, 32, 96>}, {transform_indices = @transform_9, window_bounds = array<i64: 1, 1, 96>}, {transform_indices = @transform_10, window_bounds = array<i64: 1, 32, 32>}, {transform_indices = @transform_11, window_bounds = array<i64: 1, 1, 32>}, {transform_indices = @transform_12, window_bounds = array<i64: 1, 32, 64>}, {transform_indices = @transform_13, window_bounds = array<i64: 1, 1, 64>}, {transform_indices = @transform_14, window_bounds = array<i64: 1, 64, 32>}, {transform_indices = @transform_15, window_bounds = array<i64: 1, 1, 32>}, {pipeline_mode = #tpu.pipeline_mode<synchronous>, transform_indices = @transform_16, window_bounds = array<i64: 1, 32>}, {pipeline_mode = #tpu.pipeline_mode<synchronous>, transform_indices = @transform_17, window_bounds = array<i64: 1, 32>}, {transform_indices = @transform_18, window_bounds = array<i64: 1, 8, 32>}]} {
    %c0_i32 = arith.constant 0 : i32
    %0 = arith.cmpi eq, %arg1, %c0_i32 : i32
    %1 = arith.extui %0 : i1 to i32
    %c0_i32_0 = arith.constant 0 : i32
    %2 = arith.cmpi ne, %1, %c0_i32_0 : i32
    scf.if %2 {
      %c0_61 = arith.constant 0 : index
      %c0_62 = arith.constant 0 : index
      %c0_63 = arith.constant 0 : index
      %113 = vector.load %arg2[%c0_61, %c0_62, %c0_63] : memref<1x1x8xi32, #tpu.memory_space<vmem>>, vector<1x1x8xi32>
      %114 = vector.shape_cast %113 : vector<1x1x8xi32> to vector<8x1xi32>
      %c0_64 = arith.constant 0 : index
      %c0_65 = arith.constant 0 : index
      %c0_66 = arith.constant 0 : index
      %115 = vector.load %arg3[%c0_64, %c0_65, %c0_66] : memref<1x1x8xi32, #tpu.memory_space<vmem>>, vector<1x1x8xi32>
      %116 = vector.shape_cast %115 : vector<1x1x8xi32> to vector<8x1xi32>
      %c50_i32 = arith.constant 50 : i32
      %117 = vector.broadcast %c50_i32 : i32 to vector<8x1xi32>
      %118 = arith.addi %116, %117 : vector<8x1xi32>
      %119 = tpu.iota {dimensions = array<i32: 1>} : vector<8x67xi32>
      %120 = vector.broadcast %114 : vector<8x1xi32> to vector<8x67xi32>
      %121 = arith.cmpi eq, %119, %120 : vector<8x67xi32>
      %122 = vector.broadcast %118 : vector<8x1xi32> to vector<8x67xi32>
      %123 = arith.cmpi eq, %119, %122 : vector<8x67xi32>
      %124 = arith.ori %121, %123 : vector<8x67xi1>
      %125 = arith.extui %124 : vector<8x67xi1> to vector<8x67xi32>
      %126 = arith.sitofp %125 : vector<8x67xi32> to vector<8x67xf32>
      %c0_67 = arith.constant 0 : index
      %c0_68 = arith.constant 0 : index
      %127 = vector.load %arg5[%c0_67, %c0_68] : memref<67x32xf32, #tpu.memory_space<vmem>>, vector<67x32xf32>
      %cst_69 = arith.constant dense<0.000000e+00> : vector<8x32xf32>
      %128 = tpu.matmul %126, %127, %cst_69 {dimension_numbers = #tpu.dot_dimension_numbers<[1], [0], [0], [1], [0, 0, 1, 1], [], []>} : vector<8x67xf32>, vector<67x32xf32>, vector<8x32xf32> -> vector<8x32xf32>
      %c0_70 = arith.constant 0 : index
      %c0_71 = arith.constant 0 : index
      %129 = vector.load %arg21[%c0_70, %c0_71] : memref<8x32xf32, #tpu.memory_space<vmem>>, vector<8x32xf32>
      tpu.vector_store %arg21[%c0_70, %c0_71], %128 {strides = array<i32>} : memref<8x32xf32, #tpu.memory_space<vmem>>, vector<8x32xf32>,
    } else {
    }
    %c0 = arith.constant 0 : index
    %c0_1 = arith.constant 0 : index
    %3 = vector.load %arg21[%c0, %c0_1] : memref<8x32xf32, #tpu.memory_space<vmem>>, vector<8x32xf32>
    %c0_2 = arith.constant 0 : index
    %c0_3 = arith.constant 0 : index
    %c0_4 = arith.constant 0 : index
    %4 = vector.load %arg8[%c0_2, %c0_3, %c0_4] : memref<1x1x32xf32, #tpu.memory_space<vmem>>, vector<1x1x32xf32>
    %5 = vector.shape_cast %4 : vector<1x1x32xf32> to vector<1x32xf32>
    %c0_5 = arith.constant 0 : index
    %c0_6 = arith.constant 0 : index
    %c0_7 = arith.constant 0 : index
    %6 = vector.load %arg9[%c0_5, %c0_6, %c0_7] : memref<1x1x32xf32, #tpu.memory_space<vmem>>, vector<1x1x32xf32>
    %7 = vector.shape_cast %6 : vector<1x1x32xf32> to vector<1x32xf32>
    %cst = arith.constant dense<0.000000e+00> : vector<8xf32>
    %8 = vector.multi_reduction <add>, %3, %cst [1] : vector<8x32xf32> to vector<8xf32>
    %9 = vector.shape_cast %8 : vector<8xf32> to vector<8x1xf32>
    %cst_8 = arith.constant 3.200000e+01 : f32
    %10 = vector.broadcast %cst_8 : f32 to vector<8x1xf32>
    %11 = arith.divf %9, %10 : vector<8x1xf32>
    %12 = vector.broadcast %11 : vector<8x1xf32> to vector<8x32xf32>
    %13 = arith.subf %3, %12 : vector<8x32xf32>
    %14 = arith.mulf %13, %13 : vector<8x32xf32>
    %cst_9 = arith.constant dense<0.000000e+00> : vector<8xf32>
    %15 = vector.multi_reduction <add>, %14, %cst_9 [1] : vector<8x32xf32> to vector<8xf32>
    %16 = vector.shape_cast %15 : vector<8xf32> to vector<8x1xf32>
    %cst_10 = arith.constant 3.200000e+01 : f32
    %17 = vector.broadcast %cst_10 : f32 to vector<8x1xf32>
    %18 = arith.divf %16, %17 : vector<8x1xf32>
    %19 = vector.broadcast %11 : vector<8x1xf32> to vector<8x32xf32>
    %20 = arith.subf %3, %19 : vector<8x32xf32>
    %cst_11 = arith.constant 9.99999997E-7 : f32
    %21 = vector.broadcast %cst_11 : f32 to vector<8x1xf32>
    %22 = arith.addf %18, %21 : vector<8x1xf32>
    %23 = math.rsqrt %22 : vector<8x1xf32>
    %24 = vector.broadcast %23 : vector<8x1xf32> to vector<8x32xf32>
    %25 = arith.mulf %20, %24 : vector<8x32xf32>
    %26 = vector.broadcast %5 : vector<1x32xf32> to vector<8x32xf32>
    %27 = arith.mulf %25, %26 : vector<8x32xf32>
    %28 = vector.broadcast %7 : vector<1x32xf32> to vector<8x32xf32>
    %29 = arith.addf %27, %28 : vector<8x32xf32>
    %c0_12 = arith.constant 0 : index
    %c0_13 = arith.constant 0 : index
    %c0_14 = arith.constant 0 : index
    %30 = vector.load %arg10[%c0_12, %c0_13, %c0_14] : memref<1x32x96xf32, #tpu.memory_space<vmem>>, vector<1x32x96xf32>
    %31 = vector.shape_cast %30 : vector<1x32x96xf32> to vector<32x96xf32>
    %cst_15 = arith.constant dense<0.000000e+00> : vector<8x96xf32>
    %32 = tpu.matmul %29, %31, %cst_15 {dimension_numbers = #tpu.dot_dimension_numbers<[1], [0], [0], [1], [0, 0, 1, 1], [], []>} : vector<8x32xf32>, vector<32x96xf32>, vector<8x96xf32> -> vector<8x96xf32>
    %c0_16 = arith.constant 0 : index
    %c0_17 = arith.constant 0 : index
    %c0_18 = arith.constant 0 : index
    %33 = vector.load %arg11[%c0_16, %c0_17, %c0_18] : memref<1x1x96xf32, #tpu.memory_space<vmem>>, vector<1x1x96xf32>
    %34 = vector.shape_cast %33 : vector<1x1x96xf32> to vector<1x96xf32>
    %35 = vector.broadcast %34 : vector<1x96xf32> to vector<8x96xf32>
    %36 = arith.addf %32, %35 : vector<8x96xf32>
    %37 = vector.extract_strided_slice %36 {offsets = [0, 0], sizes = [8, 32], strides = [1, 1]} : vector<8x96xf32> to vector<8x32xf32>
    %38 = vector.extract_strided_slice %36 {offsets = [0, 32], sizes = [8, 32], strides = [1, 1]} : vector<8x96xf32> to vector<8x32xf32>
    %39 = vector.extract_strided_slice %36 {offsets = [0, 64], sizes = [8, 32], strides = [1, 1]} : vector<8x96xf32> to vector<8x32xf32>
    %c0_19 = arith.constant 0 : index
    %c0_20 = arith.constant 0 : index
    %40 = vector.load %arg6[%c0_19, %c0_20] : memref<32x32xf32, #tpu.memory_space<vmem>>, vector<32x32xf32>
    %41 = tpu.concatenate %38, %38, %38, %38 in 0 : vector<8x32xf32>, vector<8x32xf32>, vector<8x32xf32>, vector<8x32xf32> -> vector<32x32xf32>
    %42 = arith.mulf %41, %40 : vector<32x32xf32>
    %43 = tpu.concatenate %39, %39, %39, %39 in 0 : vector<8x32xf32>, vector<8x32xf32>, vector<8x32xf32>, vector<8x32xf32> -> vector<32x32xf32>
    %44 = arith.mulf %43, %40 : vector<32x32xf32>
    %45 = tpu.transpose %42, [1, 0] : vector<32x32xf32> -> vector<32x32xf32>
    %cst_21 = arith.constant dense<0.000000e+00> : vector<8x32xf32>
    %46 = tpu.matmul %37, %45, %cst_21 {dimension_numbers = #tpu.dot_dimension_numbers<[1], [0], [0], [1], [0, 0, 1, 1], [], []>} : vector<8x32xf32>, vector<32x32xf32>, vector<8x32xf32> -> vector<8x32xf32>
    %cst_22 = arith.constant 0.353553385 : f32
    %47 = vector.broadcast %cst_22 : f32 to vector<8x32xf32>
    %48 = arith.mulf %46, %47 : vector<8x32xf32>
    %c0_23 = arith.constant 0 : index
    %c0_24 = arith.constant 0 : index
    %c0_25 = arith.constant 0 : index
    %49 = vector.load %arg4[%c0_23, %c0_24, %c0_25] : memref<1x1x32xf32, #tpu.memory_space<vmem>>, vector<1x1x32xf32>
    %50 = vector.shape_cast %49 : vector<1x1x32xf32> to vector<1x32xf32>
    %51 = vector.broadcast %50 : vector<1x32xf32> to vector<8x32xf32>
    %52 = arith.addf %48, %51 : vector<8x32xf32>
    %cst_26 = arith.constant dense<0xFF800000> : vector<8xf32>
    %53 = vector.multi_reduction <maximumf>, %52, %cst_26 [1] : vector<8x32xf32> to vector<8xf32>
    %54 = vector.shape_cast %53 : vector<8xf32> to vector<8x1xf32>
    %55 = vector.broadcast %54 : vector<8x1xf32> to vector<8x32xf32>
    %56 = arith.subf %52, %55 : vector<8x32xf32>
    %57 = math.exp %56 : vector<8x32xf32>
    %c0_27 = arith.constant 0 : index
    %c0_28 = arith.constant 0 : index
    %58 = vector.load %arg7[%c0_27, %c0_28] : memref<32x32xf32, #tpu.memory_space<vmem>>, vector<32x32xf32>
    %cst_29 = arith.constant dense<0.000000e+00> : vector<8x32xf32>
    %59 = tpu.matmul %57, %58, %cst_29 {dimension_numbers = #tpu.dot_dimension_numbers<[1], [0], [0], [1], [0, 0, 1, 1], [], []>} : vector<8x32xf32>, vector<32x32xf32>, vector<8x32xf32> -> vector<8x32xf32>
    %60 = arith.divf %57, %59 : vector<8x32xf32>
    %cst_30 = arith.constant dense<0.000000e+00> : vector<8x32xf32>
    %61 = tpu.matmul %60, %44, %cst_30 {dimension_numbers = #tpu.dot_dimension_numbers<[1], [0], [0], [1], [0, 0, 1, 1], [], []>} : vector<8x32xf32>, vector<32x32xf32>, vector<8x32xf32> -> vector<8x32xf32>
    %c0_31 = arith.constant 0 : index
    %c0_32 = arith.constant 0 : index
    %c0_33 = arith.constant 0 : index
    %62 = vector.load %arg12[%c0_31, %c0_32, %c0_33] : memref<1x32x32xf32, #tpu.memory_space<vmem>>, vector<1x32x32xf32>
    %63 = vector.shape_cast %62 : vector<1x32x32xf32> to vector<32x32xf32>
    %cst_34 = arith.constant dense<0.000000e+00> : vector<8x32xf32>
    %64 = tpu.matmul %61, %63, %cst_34 {dimension_numbers = #tpu.dot_dimension_numbers<[1], [0], [0], [1], [0, 0, 1, 1], [], []>} : vector<8x32xf32>, vector<32x32xf32>, vector<8x32xf32> -> vector<8x32xf32>
    %c0_35 = arith.constant 0 : index
    %c0_36 = arith.constant 0 : index
    %c0_37 = arith.constant 0 : index
    %65 = vector.load %arg13[%c0_35, %c0_36, %c0_37] : memref<1x1x32xf32, #tpu.memory_space<vmem>>, vector<1x1x32xf32>
    %66 = vector.shape_cast %65 : vector<1x1x32xf32> to vector<1x32xf32>
    %67 = vector.broadcast %66 : vector<1x32xf32> to vector<8x32xf32>
    %68 = arith.addf %64, %67 : vector<8x32xf32>
    %69 = arith.addf %3, %68 : vector<8x32xf32>
    %cst_38 = arith.constant dense<0.000000e+00> : vector<8xf32>
    %70 = vector.multi_reduction <add>, %69, %cst_38 [1] : vector<8x32xf32> to vector<8xf32>
    %71 = vector.shape_cast %70 : vector<8xf32> to vector<8x1xf32>
    %cst_39 = arith.constant 3.200000e+01 : f32
    %72 = vector.broadcast %cst_39 : f32 to vector<8x1xf32>
    %73 = arith.divf %71, %72 : vector<8x1xf32>
    %74 = vector.broadcast %73 : vector<8x1xf32> to vector<8x32xf32>
    %75 = arith.subf %69, %74 : vector<8x32xf32>
    %76 = arith.mulf %75, %75 : vector<8x32xf32>
    %cst_40 = arith.constant dense<0.000000e+00> : vector<8xf32>
    %77 = vector.multi_reduction <add>, %76, %cst_40 [1] : vector<8x32xf32> to vector<8xf32>
    %78 = vector.shape_cast %77 : vector<8xf32> to vector<8x1xf32>
    %cst_41 = arith.constant 3.200000e+01 : f32
    %79 = vector.broadcast %cst_41 : f32 to vector<8x1xf32>
    %80 = arith.divf %78, %79 : vector<8x1xf32>
    %81 = vector.broadcast %73 : vector<8x1xf32> to vector<8x32xf32>
    %82 = arith.subf %69, %81 : vector<8x32xf32>
    %cst_42 = arith.constant 9.99999997E-7 : f32
    %83 = vector.broadcast %cst_42 : f32 to vector<8x1xf32>
    %84 = arith.addf %80, %83 : vector<8x1xf32>
    %85 = math.rsqrt %84 : vector<8x1xf32>
    %86 = vector.broadcast %85 : vector<8x1xf32> to vector<8x32xf32>
    %87 = arith.mulf %82, %86 : vector<8x32xf32>
    %88 = vector.broadcast %5 : vector<1x32xf32> to vector<8x32xf32>
    %89 = arith.mulf %87, %88 : vector<8x32xf32>
    %90 = vector.broadcast %7 : vector<1x32xf32> to vector<8x32xf32>
    %91 = arith.addf %89, %90 : vector<8x32xf32>
    %c0_43 = arith.constant 0 : index
    %c0_44 = arith.constant 0 : index
    %c0_45 = arith.constant 0 : index
    %92 = vector.load %arg14[%c0_43, %c0_44, %c0_45] : memref<1x32x64xf32, #tpu.memory_space<vmem>>, vector<1x32x64xf32>
    %93 = vector.shape_cast %92 : vector<1x32x64xf32> to vector<32x64xf32>
    %cst_46 = arith.constant dense<0.000000e+00> : vector<8x64xf32>
    %94 = tpu.matmul %91, %93, %cst_46 {dimension_numbers = #tpu.dot_dimension_numbers<[1], [0], [0], [1], [0, 0, 1, 1], [], []>} : vector<8x32xf32>, vector<32x64xf32>, vector<8x64xf32> -> vector<8x64xf32>
    %c0_47 = arith.constant 0 : index
    %c0_48 = arith.constant 0 : index
    %c0_49 = arith.constant 0 : index
    %95 = vector.load %arg15[%c0_47, %c0_48, %c0_49] : memref<1x1x64xf32, #tpu.memory_space<vmem>>, vector<1x1x64xf32>
    %96 = vector.shape_cast %95 : vector<1x1x64xf32> to vector<1x64xf32>
    %97 = vector.broadcast %96 : vector<1x64xf32> to vector<8x64xf32>
    %98 = arith.addf %94, %97 : vector<8x64xf32>
    %cst_50 = arith.constant 0.000000e+00 : f32
    %99 = vector.broadcast %cst_50 : f32 to vector<8x64xf32>
    %100 = arith.maximumf %98, %99 : vector<8x64xf32>
    %c0_51 = arith.constant 0 : index
    %c0_52 = arith.constant 0 : index
    %c0_53 = arith.constant 0 : index
    %101 = vector.load %arg16[%c0_51, %c0_52, %c0_53] : memref<1x64x32xf32, #tpu.memory_space<vmem>>, vector<1x64x32xf32>
    %102 = vector.shape_cast %101 : vector<1x64x32xf32> to vector<64x32xf32>
    %cst_54 = arith.constant dense<0.000000e+00> : vector<8x32xf32>
    %103 = tpu.matmul %100, %102, %cst_54 {dimension_numbers = #tpu.dot_dimension_numbers<[1], [0], [0], [1], [0, 0, 1, 1], [], []>} : vector<8x64xf32>, vector<64x32xf32>, vector<8x32xf32> -> vector<8x32xf32>
    %c0_55 = arith.constant 0 : index
    %c0_56 = arith.constant 0 : index
    %c0_57 = arith.constant 0 : index
    %104 = vector.load %arg17[%c0_55, %c0_56, %c0_57] : memref<1x1x32xf32, #tpu.memory_space<vmem>>, vector<1x1x32xf32>
    %105 = vector.shape_cast %104 : vector<1x1x32xf32> to vector<1x32xf32>
    %106 = vector.broadcast %105 : vector<1x32xf32> to vector<8x32xf32>
    %107 = arith.addf %103, %106 : vector<8x32xf32>
    %108 = arith.addf %69, %107 : vector<8x32xf32>
    %c0_58 = arith.constant 0 : index
    %c0_59 = arith.constant 0 : index
    %109 = vector.load %arg21[%c0_58, %c0_59] : memref<8x32xf32, #tpu.memory_space<vmem>>, vector<8x32xf32>
    tpu.vector_store %arg21[%c0_58, %c0_59], %108 {strides = array<i32>} : memref<8x32xf32, #tpu.memory_space<vmem>>, vector<8x32xf32>,
    %c1_i32 = arith.constant 1 : i32
    %110 = arith.cmpi eq, %arg1, %c1_i32 : i32
    %111 = arith.extui %110 : i1 to i32
    %c0_i32_60 = arith.constant 0 : i32
    %112 = arith.cmpi ne, %111, %c0_i32_60 : i32
    scf.if %112 {
      %c0_61 = arith.constant 0 : index
      %c0_62 = arith.constant 0 : index
      %113 = vector.load %arg18[%c0_61, %c0_62] : memref<1x32xf32, #tpu.memory_space<vmem>>, vector<1x32xf32>
      %c0_63 = arith.constant 0 : index
      %c0_64 = arith.constant 0 : index
      %114 = vector.load %arg19[%c0_63, %c0_64] : memref<1x32xf32, #tpu.memory_space<vmem>>, vector<1x32xf32>
      %cst_65 = arith.constant dense<0.000000e+00> : vector<8xf32>
      %115 = vector.multi_reduction <add>, %108, %cst_65 [1] : vector<8x32xf32> to vector<8xf32>
      %116 = vector.shape_cast %115 : vector<8xf32> to vector<8x1xf32>
      %cst_66 = arith.constant 3.200000e+01 : f32
      %117 = vector.broadcast %cst_66 : f32 to vector<8x1xf32>
      %118 = arith.divf %116, %117 : vector<8x1xf32>
      %119 = vector.broadcast %118 : vector<8x1xf32> to vector<8x32xf32>
      %120 = arith.subf %108, %119 : vector<8x32xf32>
      %121 = arith.mulf %120, %120 : vector<8x32xf32>
      %cst_67 = arith.constant dense<0.000000e+00> : vector<8xf32>
      %122 = vector.multi_reduction <add>, %121, %cst_67 [1] : vector<8x32xf32> to vector<8xf32>
      %123 = vector.shape_cast %122 : vector<8xf32> to vector<8x1xf32>
      %cst_68 = arith.constant 3.200000e+01 : f32
      %124 = vector.broadcast %cst_68 : f32 to vector<8x1xf32>
      %125 = arith.divf %123, %124 : vector<8x1xf32>
      %126 = vector.broadcast %118 : vector<8x1xf32> to vector<8x32xf32>
      %127 = arith.subf %108, %126 : vector<8x32xf32>
      %cst_69 = arith.constant 9.99999997E-7 : f32
      %128 = vector.broadcast %cst_69 : f32 to vector<8x1xf32>
      %129 = arith.addf %125, %128 : vector<8x1xf32>
      %130 = math.rsqrt %129 : vector<8x1xf32>
      %131 = vector.broadcast %130 : vector<8x1xf32> to vector<8x32xf32>
      %132 = arith.mulf %127, %131 : vector<8x32xf32>
      %133 = vector.broadcast %113 : vector<1x32xf32> to vector<8x32xf32>
      %134 = arith.mulf %132, %133 : vector<8x32xf32>
      %135 = vector.broadcast %114 : vector<1x32xf32> to vector<8x32xf32>
      %136 = arith.addf %134, %135 : vector<8x32xf32>
      %c0_70 = arith.constant 0 : index
      %c0_71 = arith.constant 0 : index
      %c0_72 = arith.constant 0 : index
      %137 = vector.load %arg20[%c0_70, %c0_71, %c0_72] : memref<1x8x32xf32, #tpu.memory_space<vmem>>, vector<1x8x32xf32>
      %138 = vector.shape_cast %137 : vector<1x8x32xf32> to vector<8x32xf32>
      %139 = vector.shape_cast %136 : vector<8x32xf32> to vector<1x8x32xf32>
      tpu.vector_store %arg20[%c0_70, %c0_71, %c0_72], %139 {strides = array<i32>} : memref<1x8x32xf32, #tpu.memory_space<vmem>>, vector<1x8x32xf32>,
    } else {
    }
    return
  }
  func.func @transform_0(%arg0: i32, %arg1: i32) -> (i32, i32, i32) {
    %c0_i32 = arith.constant 0 : i32
    %c0_i32_0 = arith.constant 0 : i32
    %c0_i32_1 = arith.constant 0 : i32
    return %arg0, %c0_i32, %c0_i32_0 : i32, i32, i32
  }
  func.func @transform_1(%arg0: i32, %arg1: i32) -> (i32, i32, i32) {
    %c0_i32 = arith.constant 0 : i32
    %c0_i32_0 = arith.constant 0 : i32
    %c0_i32_1 = arith.constant 0 : i32
    return %arg0, %c0_i32, %c0_i32_0 : i32, i32, i32
  }
  func.func @transform_2(%arg0: i32, %arg1: i32) -> (i32, i32, i32) {
    %c0_i32 = arith.constant 0 : i32
    %c0_i32_0 = arith.constant 0 : i32
    %c0_i32_1 = arith.constant 0 : i32
    return %arg0, %c0_i32, %c0_i32_0 : i32, i32, i32
  }
  func.func @transform_3(%arg0: i32, %arg1: i32) -> (i32, i32) {
    %c0_i32 = arith.constant 0 : i32
    %c0_i32_0 = arith.constant 0 : i32
    %c0_i32_1 = arith.constant 0 : i32
    return %c0_i32, %c0_i32_0 : i32, i32
  }
  func.func @transform_4(%arg0: i32, %arg1: i32) -> (i32, i32) {
    %c0_i32 = arith.constant 0 : i32
    %c0_i32_0 = arith.constant 0 : i32
    %c0_i32_1 = arith.constant 0 : i32
    return %c0_i32, %c0_i32_0 : i32, i32
  }
  func.func @transform_5(%arg0: i32, %arg1: i32) -> (i32, i32) {
    %c0_i32 = arith.constant 0 : i32
    %c0_i32_0 = arith.constant 0 : i32
    %c0_i32_1 = arith.constant 0 : i32
    return %c0_i32, %c0_i32_0 : i32, i32
  }
  func.func @transform_6(%arg0: i32, %arg1: i32) -> (i32, i32, i32) {
    %c0_i32 = arith.constant 0 : i32
    %c0_i32_0 = arith.constant 0 : i32
    %c0_i32_1 = arith.constant 0 : i32
    return %arg1, %c0_i32, %c0_i32_0 : i32, i32, i32
  }
  func.func @transform_7(%arg0: i32, %arg1: i32) -> (i32, i32, i32) {
    %c0_i32 = arith.constant 0 : i32
    %c0_i32_0 = arith.constant 0 : i32
    %c0_i32_1 = arith.constant 0 : i32
    return %arg1, %c0_i32, %c0_i32_0 : i32, i32, i32
  }
  func.func @transform_8(%arg0: i32, %arg1: i32) -> (i32, i32, i32) {
    %c0_i32 = arith.constant 0 : i32
    %c0_i32_0 = arith.constant 0 : i32
    %c0_i32_1 = arith.constant 0 : i32
    return %arg1, %c0_i32, %c0_i32_0 : i32, i32, i32
  }
  func.func @transform_9(%arg0: i32, %arg1: i32) -> (i32, i32, i32) {
    %c0_i32 = arith.constant 0 : i32
    %c0_i32_0 = arith.constant 0 : i32
    %c0_i32_1 = arith.constant 0 : i32
    return %arg1, %c0_i32, %c0_i32_0 : i32, i32, i32
  }
  func.func @transform_10(%arg0: i32, %arg1: i32) -> (i32, i32, i32) {
    %c0_i32 = arith.constant 0 : i32
    %c0_i32_0 = arith.constant 0 : i32
    %c0_i32_1 = arith.constant 0 : i32
    return %arg1, %c0_i32, %c0_i32_0 : i32, i32, i32
  }
  func.func @transform_11(%arg0: i32, %arg1: i32) -> (i32, i32, i32) {
    %c0_i32 = arith.constant 0 : i32
    %c0_i32_0 = arith.constant 0 : i32
    %c0_i32_1 = arith.constant 0 : i32
    return %arg1, %c0_i32, %c0_i32_0 : i32, i32, i32
  }
  func.func @transform_12(%arg0: i32, %arg1: i32) -> (i32, i32, i32) {
    %c0_i32 = arith.constant 0 : i32
    %c0_i32_0 = arith.constant 0 : i32
    %c0_i32_1 = arith.constant 0 : i32
    return %arg1, %c0_i32, %c0_i32_0 : i32, i32, i32
  }
  func.func @transform_13(%arg0: i32, %arg1: i32) -> (i32, i32, i32) {
    %c0_i32 = arith.constant 0 : i32
    %c0_i32_0 = arith.constant 0 : i32
    %c0_i32_1 = arith.constant 0 : i32
    return %arg1, %c0_i32, %c0_i32_0 : i32, i32, i32
  }
  func.func @transform_14(%arg0: i32, %arg1: i32) -> (i32, i32, i32) {
    %c0_i32 = arith.constant 0 : i32
    %c0_i32_0 = arith.constant 0 : i32
    %c0_i32_1 = arith.constant 0 : i32
    return %arg1, %c0_i32, %c0_i32_0 : i32, i32, i32
  }
  func.func @transform_15(%arg0: i32, %arg1: i32) -> (i32, i32, i32) {
    %c0_i32 = arith.constant 0 : i32
    %c0_i32_0 = arith.constant 0 : i32
    %c0_i32_1 = arith.constant 0 : i32
    return %arg1, %c0_i32, %c0_i32_0 : i32, i32, i32
  }
  func.func @transform_16(%arg0: i32, %arg1: i32) -> (i32, i32) {
    %c0_i32 = arith.constant 0 : i32
    %c0_i32_0 = arith.constant 0 : i32
    %c0_i32_1 = arith.constant 0 : i32
    return %c0_i32, %c0_i32_0 : i32, i32
  }
  func.func @transform_17(%arg0: i32, %arg1: i32) -> (i32, i32) {
    %c0_i32 = arith.constant 0 : i32
    %c0_i32_0 = arith.constant 0 : i32
    %c0_i32_1 = arith.constant 0 : i32
    return %c0_i32, %c0_i32_0 : i32, i32
  }
  func.func @transform_18(%arg0: i32, %arg1: i32) -> (i32, i32, i32) {
    %c0_i32 = arith.constant 0 : i32
    %c0_i32_0 = arith.constant 0 : i32
    %c0_i32_1 = arith.constant 0 : i32
    return %arg0, %c0_i32, %c0_i32_0 : i32, i32, i32
  }
}

</mosaic_0001>

<llo_original>
// kernel: tpu_custom_call.1
$region0: #{tpu_custom_call.1}
  #allocation0 [shape = 'u32[]', space=smem, size = 0x4, offset = 0x4, fixed_abs, tag = 'smem constant byte address 0x4 - core index']
  #allocation1 [shape = 'u32[72,128]{1,0:T(1,128)}', space=vmem, size = 0x9000, scoped, tag = 'internal scratch']
  #allocation2 [shape = 'f32[8,32]{1,0:T(8,128)}', space=vmem, size = 0x1000, scoped, tag = 'scratch operand']
  %s0 = inlined_call_operand.vmem [shape: s32[2,1,8], index: 0, kind: input, shape index: {}]
  %s1 = inlined_call_operand.vmem [shape: s32[2,1,8], index: 1, kind: input, shape index: {}]
  %s2 = inlined_call_operand.vmem [shape: f32[2,1,32], index: 2, kind: input, shape index: {}]
  %s3 = inlined_call_operand.vmem [shape: f32[67,32], index: 3, kind: input, shape index: {}]
  %s4 = inlined_call_operand.vmem [shape: f32[32,32], index: 4, kind: input, shape index: {}]
  %s5 = inlined_call_operand.hbm [shape: f32[32,32], index: 5, kind: input, shape index: {}]
  %s6 = inlined_call_operand.vmem [shape: f32[2,1,32], index: 6, kind: input, shape index: {}]
  %s7 = inlined_call_operand.vmem [shape: f32[2,1,32], index: 7, kind: input, shape index: {}]
  %s8 = inlined_call_operand.vmem [shape: f32[2,32,96], index: 8, kind: input, shape index: {}]
  %s9 = inlined_call_operand.vmem [shape: f32[2,1,96], index: 9, kind: input, shape index: {}]
  %s10 = inlined_call_operand.vmem [shape: f32[2,32,32], index: 10, kind: input, shape index: {}]
  %s11 = inlined_call_operand.vmem [shape: f32[2,1,32], index: 11, kind: input, shape index: {}]
  %s12 = inlined_call_operand.vmem [shape: f32[2,32,64], index: 12, kind: input, shape index: {}]
  %s13 = inlined_call_operand.vmem [shape: f32[2,1,64], index: 13, kind: input, shape index: {}]
  %s14 = inlined_call_operand.vmem [shape: f32[2,64,32], index: 14, kind: input, shape index: {}]
  %s15 = inlined_call_operand.vmem [shape: f32[2,1,32], index: 15, kind: input, shape index: {}]
  %s16 = inlined_call_operand.vmem [shape: f32[1,32], index: 16, kind: input, shape index: {}]
  %s17 = inlined_call_operand.vmem [shape: f32[1,32], index: 17, kind: input, shape index: {}]
  %s18 = inlined_call_operand.hbm [shape: f32[2,8,32], index: 18, kind: output, shape index: {}]
  %s19 = sld [smem:[#allocation0]]
  $region117: #{tpu_custom_call.1} parent=0
    _
  %s21 = ssub.s32 1, %s19
  %s22 = scalar_select 0, %s21, %s19
  $region1: #{tpu_custom_call.1} parent=0
    #allocation3 [shape = 'u8[16384]{0}', space=vmem, size = 0x4000, scoped, tag = 'input window, operand 5, single buffered']
    #allocation4 [shape = 's32[2]{0}', space=sflag, size = 0x8, scoped, tag = 'scoped memory for tpu_custom_call.1']
    #allocation5 [shape = 's32[2]{0}', space=sflag, size = 0x8, scoped, tag = 'scoped memory for tpu_custom_call.1']
    #allocation6 [shape = 'u8[8192]{0}', space=vmem, size = 0x2000, scoped, tag = 'output window, operand 0']
    %23 = vsyncpa [#allocation4], 0
    %24 = vsyncpa [#allocation5], 0
    %s25 = scalar_lea.sflag [#allocation5], 1
    %26 = vsyncpa %s25, 0
    loop: start=0, step=1, limit=6
    $region2: #{tpu_custom_call.1} parent=1 // loop_pre_header
      _
    $region3: #{tpu_custom_call.1} parent=1 // loop_header
      %s28 = sphi 0, %s32
      %p29 = scmp.ge.s32.totalorder %s28, 6
      %s35 = sphi 0, %s47
      %s36 = sphi 0, %s43
      %s37 = sphi 0, %s35
      %s38 = sphi 0, %s36
      %s39 = sphi 0, %s37
      %s40 = sphi 0, %s38
      %s50 = sphi 0, %s52
      %s53 = sphi 0, %s50
      %s54 = sphi 0, %s53
      %s70 = sphi 0, %s54
      %s76 = sphi 0, %s78
      %s79 = sphi 0, %s76
      %s80 = sphi 0, %s79
      %s96 = sphi 0, %s80
      %s102 = sphi 0, %s104
      %s105 = sphi 0, %s102
      %s106 = sphi 0, %s105
      %s122 = sphi 0, %s106
      %s126 = sphi 0, %s126
      %s128 = sphi 0, %s126
      %s129 = sphi 0, %s128
      %s143 = sphi 0, %s129
      %s147 = sphi 0, %s147
      %s149 = sphi 0, %s147
      %s150 = sphi 0, %s149
      %s164 = sphi 0, %s150
      %s168 = sphi 0, %s168
      %s170 = sphi 0, %s168
      %s171 = sphi 0, %s170
      %s185 = sphi 0, %s171
      %s191 = sphi 0, %s193
      %s194 = sphi 0, %s191
      %s195 = sphi 0, %s194
      %s211 = sphi 0, %s195
      %s217 = sphi 0, %s219
      %s220 = sphi 0, %s217
      %s221 = sphi 0, %s220
      %s237 = sphi 0, %s221
      %s243 = sphi 0, %s245
      %s246 = sphi 0, %s243
      %s247 = sphi 0, %s246
      %s263 = sphi 0, %s247
      %s269 = sphi 0, %s271
      %s272 = sphi 0, %s269
      %s273 = sphi 0, %s272
      %s289 = sphi 0, %s273
      %s295 = sphi 0, %s297
      %s298 = sphi 0, %s295
      %s299 = sphi 0, %s298
      %s315 = sphi 0, %s299
      %s321 = sphi 0, %s323
      %s324 = sphi 0, %s321
      %s325 = sphi 0, %s324
      %s341 = sphi 0, %s325
      %s347 = sphi 0, %s349
      %s350 = sphi 0, %s347
      %s351 = sphi 0, %s350
      %s367 = sphi 0, %s351
      %s373 = sphi 0, %s375
      %s376 = sphi 0, %s373
      %s377 = sphi 0, %s376
      %s393 = sphi 0, %s377
      %s399 = sphi 0, %s401
      %s402 = sphi 0, %s399
      %s403 = sphi 0, %s402
      %s419 = sphi 0, %s403
      %s425 = sphi 0, %s427
      %s428 = sphi 0, %s425
      %s429 = sphi 0, %s428
      %s445 = sphi 0, %s429
      %s449 = sphi 0, %s449
      %s451 = sphi 0, %s449
      %s452 = sphi 0, %s451
      %s466 = sphi 0, %s452
      %s470 = sphi 0, %s470
      %s472 = sphi 0, %s470
      %s473 = sphi 0, %s472
      %s487 = sphi 0, %s473
      %s493 = sphi 0, %s495
      %s496 = sphi 0, %s493
      %s497 = sphi 0, %s496
      %s513 = sphi 0, %s497
    $region4: #{tpu_custom_call.1} parent=1 // loop_header_branch
      %31 = sbr.rel (%p29) target = $region8
    $region5: #{tpu_custom_call.1} parent=1 // loop_body
      %s33 = ssub.s32 %s28, 1
      %s34 = ssub.s32 %s28, 2
      %s41 = sadd.s32 1, %s36
      %p42 = scmp.ge.s32.totalorder %s41, 2
      %s43 = scalar_select %p42, 0, %s41
      %s44 = sadd.s32 1, %s35
      %s45 = scalar_select %p42, %s44, %s35
      %p46 = scmp.ge.s32.totalorder %s45, 2
      %s47 = scalar_select %p46, 0, %s45
      %s48 = ssub.s32 %s35, %s47
      %p49 = scmp.eq.s32.totalorder %s48, 0
      %s51 = sadd.s32 %s50, 1
      %s52 = scalar_select %p49, %s50, %s51
      %p55 = pneg %p49
      %p56 = scmp.eq.s32.totalorder %s28, 3
      %p57 = por %p55, %p56
      %p58 = scmp.ne.s32.totalorder %s50, %s53
      %p59 = scmp.eq.s32.totalorder %s28, 0
      %p60 = por %p58, %p59
      %p61 = scmp.ne.s32.totalorder %s50, %s53
      %p62 = scmp.eq.s32.totalorder %s33, 3
      %p63 = por %p61, %p62
      %p64 = scmp.ne.s32.totalorder %s53, %s54
      %p65 = scmp.eq.s32.totalorder %s33, 0
      %p66 = por %p64, %p65
      %p67 = scmp.ne.s32.totalorder %s53, %s54
      %p68 = scmp.eq.s32.totalorder %s34, 3
      %p69 = por %p67, %p68
      %p71 = scmp.ne.s32.totalorder %s54, %s70
      %p72 = scmp.eq.s32.totalorder %s34, 0
      %p73 = por %p71, %p72
      %s74 = ssub.s32 %s35, %s47
      %p75 = scmp.eq.s32.totalorder %s74, 0
      %s77 = sadd.s32 %s76, 1
      %s78 = scalar_select %p75, %s76, %s77
      %p81 = pneg %p75
      %p82 = scmp.eq.s32.totalorder %s28, 3
      %p83 = por %p81, %p82
      %p84 = scmp.ne.s32.totalorder %s76, %s79
      %p85 = scmp.eq.s32.totalorder %s28, 0
      %p86 = por %p84, %p85
      %p87 = scmp.ne.s32.totalorder %s76, %s79
      %p88 = scmp.eq.s32.totalorder %s33, 3
      %p89 = por %p87, %p88
      %p90 = scmp.ne.s32.totalorder %s79, %s80
      %p91 = scmp.eq.s32.totalorder %s33, 0
      %p92 = por %p90, %p91
      %p93 = scmp.ne.s32.totalorder %s79, %s80
      %p94 = scmp.eq.s32.totalorder %s34, 3
      %p95 = por %p93, %p94
      %p97 = scmp.ne.s32.totalorder %s80, %s96
      %p98 = scmp.eq.s32.totalorder %s34, 0
      %p99 = por %p97, %p98
      %s100 = ssub.s32 %s35, %s47
      %p101 = scmp.eq.s32.totalorder %s100, 0
      %s103 = sadd.s32 %s102, 1
      %s104 = scalar_select %p101, %s102, %s103
      %p107 = pneg %p101
      %p108 = scmp.eq.s32.totalorder %s28, 3
      %p109 = por %p107, %p108
      %p110 = scmp.ne.s32.totalorder %s102, %s105
      %p111 = scmp.eq.s32.totalorder %s28, 0
      %p112 = por %p110, %p111
      %p113 = scmp.ne.s32.totalorder %s102, %s105
      %p114 = scmp.eq.s32.totalorder %s33, 3
      %p115 = por %p113, %p114
      %p116 = scmp.ne.s32.totalorder %s105, %s106
      %p117 = scmp.eq.s32.totalorder %s33, 0
      %p118 = por %p116, %p117
      %p119 = scmp.ne.s32.totalorder %s105, %s106
      %p120 = scmp.eq.s32.totalorder %s34, 3
      %p121 = por %p119, %p120
      %p123 = scmp.ne.s32.totalorder %s106, %s122
      %p124 = scmp.eq.s32.totalorder %s34, 0
      %p125 = por %p123, %p124
      %s127 = sadd.s32 %s126, 1
      %p130 = scmp.eq.s32.totalorder %s28, 3
      %p131 = scmp.ne.s32.totalorder %s126, %s128
      %p132 = scmp.eq.s32.totalorder %s28, 0
      %p133 = por %p131, %p132
      %p134 = scmp.ne.s32.totalorder %s126, %s128
      %p135 = scmp.eq.s32.totalorder %s33, 3
      %p136 = por %p134, %p135
      %p137 = scmp.ne.s32.totalorder %s128, %s129
      %p138 = scmp.eq.s32.totalorder %s33, 0
      %p139 = por %p137, %p138
      %p140 = scmp.ne.s32.totalorder %s128, %s129
      %p141 = scmp.eq.s32.totalorder %s34, 3
      %p142 = por %p140, %p141
      %p144 = scmp.ne.s32.totalorder %s129, %s143
      %p145 = scmp.eq.s32.totalorder %s34, 0
      %p146 = por %p144, %p145
      %s148 = sadd.s32 %s147, 1
      %p151 = scmp.eq.s32.totalorder %s28, 3
      %p152 = scmp.ne.s32.totalorder %s147, %s149
      %p153 = scmp.eq.s32.totalorder %s28, 0
      %p154 = por %p152, %p153
      %p155 = scmp.ne.s32.totalorder %s147, %s149
      %p156 = scmp.eq.s32.totalorder %s33, 3
      %p157 = por %p155, %p156
      %p158 = scmp.ne.s32.totalorder %s149, %s150
      %p159 = scmp.eq.s32.totalorder %s33, 0
      %p160 = por %p158, %p159
      %p161 = scmp.ne.s32.totalorder %s149, %s150
      %p162 = scmp.eq.s32.totalorder %s34, 3
      %p163 = por %p161, %p162
      %p165 = scmp.ne.s32.totalorder %s150, %s164
      %p166 = scmp.eq.s32.totalorder %s34, 0
      %p167 = por %p165, %p166
      %s169 = sadd.s32 %s168, 1
      %p172 = scmp.eq.s32.totalorder %s28, 3
      %p173 = scmp.ne.s32.totalorder %s168, %s170
      %p174 = scmp.eq.s32.totalorder %s28, 0
      %p175 = por %p173, %p174
      %p176 = scmp.ne.s32.totalorder %s168, %s170
      %p177 = scmp.eq.s32.totalorder %s33, 3
      %p178 = por %p176, %p177
      %p179 = scmp.ne.s32.totalorder %s170, %s171
      %p180 = scmp.eq.s32.totalorder %s33, 0
      %p181 = por %p179, %p180
      %p182 = scmp.ne.s32.totalorder %s170, %s171
      %p183 = scmp.eq.s32.totalorder %s34, 3
      %p184 = por %p182, %p183
      %p186 = scmp.ne.s32.totalorder %s171, %s185
      %p187 = scmp.eq.s32.totalorder %s34, 0
      %p188 = por %p186, %p187
      %s189 = ssub.s32 %s36, %s43
      %p190 = scmp.eq.s32.totalorder %s189, 0
      %s192 = sadd.s32 %s191, 1
      %s193 = scalar_select %p190, %s191, %s192
      %p196 = pneg %p190
      %p197 = scmp.eq.s32.totalorder %s28, 3
      %p198 = por %p196, %p197
      %p199 = scmp.ne.s32.totalorder %s191, %s194
      %p200 = scmp.eq.s32.totalorder %s28, 0
      %p201 = por %p199, %p200
      %p202 = scmp.ne.s32.totalorder %s191, %s194
      %p203 = scmp.eq.s32.totalorder %s33, 3
      %p204 = por %p202, %p203
      %p205 = scmp.ne.s32.totalorder %s194, %s195
      %p206 = scmp.eq.s32.totalorder %s33, 0
      %p207 = por %p205, %p206
      %p208 = scmp.ne.s32.totalorder %s194, %s195
      %p209 = scmp.eq.s32.totalorder %s34, 3
      %p210 = por %p208, %p209
      %p212 = scmp.ne.s32.totalorder %s195, %s211
      %p213 = scmp.eq.s32.totalorder %s34, 0
      %p214 = por %p212, %p213
      %s215 = ssub.s32 %s36, %s43
      %p216 = scmp.eq.s32.totalorder %s215, 0
      %s218 = sadd.s32 %s217, 1
      %s219 = scalar_select %p216, %s217, %s218
      %p222 = pneg %p216
      %p223 = scmp.eq.s32.totalorder %s28, 3
      %p224 = por %p222, %p223
      %p225 = scmp.ne.s32.totalorder %s217, %s220
      %p226 = scmp.eq.s32.totalorder %s28, 0
      %p227 = por %p225, %p226
      %p228 = scmp.ne.s32.totalorder %s217, %s220
      %p229 = scmp.eq.s32.totalorder %s33, 3
      %p230 = por %p228, %p229
      %p231 = scmp.ne.s32.totalorder %s220, %s221
      %p232 = scmp.eq.s32.totalorder %s33, 0
      %p233 = por %p231, %p232
      %p234 = scmp.ne.s32.totalorder %s220, %s221
      %p235 = scmp.eq.s32.totalorder %s34, 3
      %p236 = por %p234, %p235
      %p238 = scmp.ne.s32.totalorder %s221, %s237
      %p239 = scmp.eq.s32.totalorder %s34, 0
      %p240 = por %p238, %p239
      %s241 = ssub.s32 %s36, %s43
      %p242 = scmp.eq.s32.totalorder %s241, 0
      %s244 = sadd.s32 %s243, 1
      %s245 = scalar_select %p242, %s243, %s244
      %p248 = pneg %p242
      %p249 = scmp.eq.s32.totalorder %s28, 3
      %p250 = por %p248, %p249
      %p251 = scmp.ne.s32.totalorder %s243, %s246
      %p252 = scmp.eq.s32.totalorder %s28, 0
      %p253 = por %p251, %p252
      %p254 = scmp.ne.s32.totalorder %s243, %s246
      %p255 = scmp.eq.s32.totalorder %s33, 3
      %p256 = por %p254, %p255
      %p257 = scmp.ne.s32.totalorder %s246, %s247
      %p258 = scmp.eq.s32.totalorder %s33, 0
      %p259 = por %p257, %p258
      %p260 = scmp.ne.s32.totalorder %s246, %s247
      %p261 = scmp.eq.s32.totalorder %s34, 3
      %p262 = por %p260, %p261
      %p264 = scmp.ne.s32.totalorder %s247, %s263
      %p265 = scmp.eq.s32.totalorder %s34, 0
      %p266 = por %p264, %p265
      %s267 = ssub.s32 %s36, %s43
      %p268 = scmp.eq.s32.totalorder %s267, 0
      %s270 = sadd.s32 %s269, 1
      %s271 = scalar_select %p268, %s269, %s270
      %p274 = pneg %p268
      %p275 = scmp.eq.s32.totalorder %s28, 3
      %p276 = por %p274, %p275
      %p277 = scmp.ne.s32.totalorder %s269, %s272
      %p278 = scmp.eq.s32.totalorder %s28, 0
      %p279 = por %p277, %p278
      %p280 = scmp.ne.s32.totalorder %s269, %s272
      %p281 = scmp.eq.s32.totalorder %s33, 3
      %p282 = por %p280, %p281
      %p283 = scmp.ne.s32.totalorder %s272, %s273
      %p284 = scmp.eq.s32.totalorder %s33, 0
      %p285 = por %p283, %p284
      %p286 = scmp.ne.s32.totalorder %s272, %s273
      %p287 = scmp.eq.s32.totalorder %s34, 3
      %p288 = por %p286, %p287
      %p290 = scmp.ne.s32.totalorder %s273, %s289
      %p291 = scmp.eq.s32.totalorder %s34, 0
      %p292 = por %p290, %p291
      %s293 = ssub.s32 %s36, %s43
      %p294 = scmp.eq.s32.totalorder %s293, 0
      %s296 = sadd.s32 %s295, 1
      %s297 = scalar_select %p294, %s295, %s296
      %p300 = pneg %p294
      %p301 = scmp.eq.s32.totalorder %s28, 3
      %p302 = por %p300, %p301
      %p303 = scmp.ne.s32.totalorder %s295, %s298
      %p304 = scmp.eq.s32.totalorder %s28, 0
      %p305 = por %p303, %p304
      %p306 = scmp.ne.s32.totalorder %s295, %s298
      %p307 = scmp.eq.s32.totalorder %s33, 3
      %p308 = por %p306, %p307
      %p309 = scmp.ne.s32.totalorder %s298, %s299
      %p310 = scmp.eq.s32.totalorder %s33, 0
      %p311 = por %p309, %p310
      %p312 = scmp.ne.s32.totalorder %s298, %s299
      %p313 = scmp.eq.s32.totalorder %s34, 3
      %p314 = por %p312, %p313
      %p316 = scmp.ne.s32.totalorder %s299, %s315
      %p317 = scmp.eq.s32.totalorder %s34, 0
      %p318 = por %p316, %p317
      %s319 = ssub.s32 %s36, %s43
      %p320 = scmp.eq.s32.totalorder %s319, 0
      %s322 = sadd.s32 %s321, 1
      %s323 = scalar_select %p320, %s321, %s322
      %p326 = pneg %p320
      %p327 = scmp.eq.s32.totalorder %s28, 3
      %p328 = por %p326, %p327
      %p329 = scmp.ne.s32.totalorder %s321, %s324
      %p330 = scmp.eq.s32.totalorder %s28, 0
      %p331 = por %p329, %p330
      %p332 = scmp.ne.s32.totalorder %s321, %s324
      %p333 = scmp.eq.s32.totalorder %s33, 3
      %p334 = por %p332, %p333
      %p335 = scmp.ne.s32.totalorder %s324, %s325
      %p336 = scmp.eq.s32.totalorder %s33, 0
      %p337 = por %p335, %p336
      %p338 = scmp.ne.s32.totalorder %s324, %s325
      %p339 = scmp.eq.s32.totalorder %s34, 3
      %p340 = por %p338, %p339
      %p342 = scmp.ne.s32.totalorder %s325, %s341
      %p343 = scmp.eq.s32.totalorder %s34, 0
      %p344 = por %p342, %p343
      %s345 = ssub.s32 %s36, %s43
      %p346 = scmp.eq.s32.totalorder %s345, 0
      %s348 = sadd.s32 %s347, 1
      %s349 = scalar_select %p346, %s347, %s348
      %p352 = pneg %p346
      %p353 = scmp.eq.s32.totalorder %s28, 3
      %p354 = por %p352, %p353
      %p355 = scmp.ne.s32.totalorder %s347, %s350
      %p356 = scmp.eq.s32.totalorder %s28, 0
      %p357 = por %p355, %p356
      %p358 = scmp.ne.s32.totalorder %s347, %s350
      %p359 = scmp.eq.s32.totalorder %s33, 3
      %p360 = por %p358, %p359
      %p361 = scmp.ne.s32.totalorder %s350, %s351
      %p362 = scmp.eq.s32.totalorder %s33, 0
      %p363 = por %p361, %p362
      %p364 = scmp.ne.s32.totalorder %s350, %s351
      %p365 = scmp.eq.s32.totalorder %s34, 3
      %p366 = por %p364, %p365
      %p368 = scmp.ne.s32.totalorder %s351, %s367
      %p369 = scmp.eq.s32.totalorder %s34, 0
      %p370 = por %p368, %p369
      %s371 = ssub.s32 %s36, %s43
      %p372 = scmp.eq.s32.totalorder %s371, 0
      %s374 = sadd.s32 %s373, 1
      %s375 = scalar_select %p372, %s373, %s374
      %p378 = pneg %p372
      %p379 = scmp.eq.s32.totalorder %s28, 3
      %p380 = por %p378, %p379
      %p381 = scmp.ne.s32.totalorder %s373, %s376
      %p382 = scmp.eq.s32.totalorder %s28, 0
      %p383 = por %p381, %p382
      %p384 = scmp.ne.s32.totalorder %s373, %s376
      %p385 = scmp.eq.s32.totalorder %s33, 3
      %p386 = por %p384, %p385
      %p387 = scmp.ne.s32.totalorder %s376, %s377
      %p388 = scmp.eq.s32.totalorder %s33, 0
      %p389 = por %p387, %p388
      %p390 = scmp.ne.s32.totalorder %s376, %s377
      %p391 = scmp.eq.s32.totalorder %s34, 3
      %p392 = por %p390, %p391
      %p394 = scmp.ne.s32.totalorder %s377, %s393
      %p395 = scmp.eq.s32.totalorder %s34, 0
      %p396 = por %p394, %p395
      %s397 = ssub.s32 %s36, %s43
      %p398 = scmp.eq.s32.totalorder %s397, 0
      %s400 = sadd.s32 %s399, 1
      %s401 = scalar_select %p398, %s399, %s400
      %p404 = pneg %p398
      %p405 = scmp.eq.s32.totalorder %s28, 3
      %p406 = por %p404, %p405
      %p407 = scmp.ne.s32.totalorder %s399, %s402
      %p408 = scmp.eq.s32.totalorder %s28, 0
      %p409 = por %p407, %p408
      %p410 = scmp.ne.s32.totalorder %s399, %s402
      %p411 = scmp.eq.s32.totalorder %s33, 3
      %p412 = por %p410, %p411
      %p413 = scmp.ne.s32.totalorder %s402, %s403
      %p414 = scmp.eq.s32.totalorder %s33, 0
      %p415 = por %p413, %p414
      %p416 = scmp.ne.s32.totalorder %s402, %s403
      %p417 = scmp.eq.s32.totalorder %s34, 3
      %p418 = por %p416, %p417
      %p420 = scmp.ne.s32.totalorder %s403, %s419
      %p421 = scmp.eq.s32.totalorder %s34, 0
      %p422 = por %p420, %p421
      %s423 = ssub.s32 %s36, %s43
      %p424 = scmp.eq.s32.totalorder %s423, 0
      %s426 = sadd.s32 %s425, 1
      %s427 = scalar_select %p424, %s425, %s426
      %p430 = pneg %p424
      %p431 = scmp.eq.s32.totalorder %s28, 3
      %p432 = por %p430, %p431
      %p433 = scmp.ne.s32.totalorder %s425, %s428
      %p434 = scmp.eq.s32.totalorder %s28, 0
      %p435 = por %p433, %p434
      %p436 = scmp.ne.s32.totalorder %s425, %s428
      %p437 = scmp.eq.s32.totalorder %s33, 3
      %p438 = por %p436, %p437
      %p439 = scmp.ne.s32.totalorder %s428, %s429
      %p440 = scmp.eq.s32.totalorder %s33, 0
      %p441 = por %p439, %p440
      %p442 = scmp.ne.s32.totalorder %s428, %s429
      %p443 = scmp.eq.s32.totalorder %s34, 3
      %p444 = por %p442, %p443
      %p446 = scmp.ne.s32.totalorder %s429, %s445
      %p447 = scmp.eq.s32.totalorder %s34, 0
      %p448 = por %p446, %p447
      %s450 = sadd.s32 %s449, 1
      %p453 = scmp.eq.s32.totalorder %s28, 3
      %p454 = scmp.ne.s32.totalorder %s449, %s451
      %p455 = scmp.eq.s32.totalorder %s28, 0
      %p456 = por %p454, %p455
      %p457 = scmp.ne.s32.totalorder %s449, %s451
      %p458 = scmp.eq.s32.totalorder %s33, 3
      %p459 = por %p457, %p458
      %p460 = scmp.ne.s32.totalorder %s451, %s452
      %p461 = scmp.eq.s32.totalorder %s33, 0
      %p462 = por %p460, %p461
      %p463 = scmp.ne.s32.totalorder %s451, %s452
      %p464 = scmp.eq.s32.totalorder %s34, 3
      %p465 = por %p463, %p464
      %p467 = scmp.ne.s32.totalorder %s452, %s466
      %p468 = scmp.eq.s32.totalorder %s34, 0
      %p469 = por %p467, %p468
      %s471 = sadd.s32 %s470, 1
      %p474 = scmp.eq.s32.totalorder %s28, 3
      %p475 = scmp.ne.s32.totalorder %s470, %s472
      %p476 = scmp.eq.s32.totalorder %s28, 0
      %p477 = por %p475, %p476
      %p478 = scmp.ne.s32.totalorder %s470, %s472
      %p479 = scmp.eq.s32.totalorder %s33, 3
      %p480 = por %p478, %p479
      %p481 = scmp.ne.s32.totalorder %s472, %s473
      %p482 = scmp.eq.s32.totalorder %s33, 0
      %p483 = por %p481, %p482
      %p484 = scmp.ne.s32.totalorder %s472, %s473
      %p485 = scmp.eq.s32.totalorder %s34, 3
      %p486 = por %p484, %p485
      %p488 = scmp.ne.s32.totalorder %s473, %s487
      %p489 = scmp.eq.s32.totalorder %s34, 0
      %p490 = por %p488, %p489
      %s491 = ssub.s32 %s35, %s47
      %p492 = scmp.eq.s32.totalorder %s491, 0
      %s494 = sadd.s32 %s493, 1
      %s495 = scalar_select %p492, %s493, %s494
      %p498 = pneg %p492
      %p499 = scmp.eq.s32.totalorder %s28, 3
      %p500 = por %p498, %p499
      %p501 = scmp.ne.s32.totalorder %s493, %s496
      %p502 = scmp.eq.s32.totalorder %s28, 0
      %p503 = por %p501, %p502
      %p504 = scmp.ne.s32.totalorder %s493, %s496
      %p505 = scmp.eq.s32.totalorder %s33, 3
      %p506 = por %p504, %p505
      %p507 = scmp.ne.s32.totalorder %s496, %s497
      %p508 = scmp.eq.s32.totalorder %s33, 0
      %p509 = por %p507, %p508
      %p510 = scmp.ne.s32.totalorder %s496, %s497
      %p511 = scmp.eq.s32.totalorder %s34, 3
      %p512 = por %p510, %p511
      %p514 = scmp.ne.s32.totalorder %s497, %s513
      %p515 = scmp.eq.s32.totalorder %s34, 0
      %p516 = por %p514, %p515
      %p517 = scmp.le.s32.totalorder 1, %s28
      %p518 = scmp.lt.s32.totalorder %s28, 5
      %p519 = pnand %p517, %p518
      %p520 = pneg %p519
      // Predicated region
      $region9: #{tpu_custom_call.1} parent=5 // pred_check
        _
      $region10: #{tpu_custom_call.1} parent=5 // pred_check_branch
        %522 = sbr.rel (%p519) target = $region12
      $region11: #{tpu_custom_call.1} parent=5 // pred_region
        %s523 = ssub.s32 %s28, 1
        // Predicated region
        $region13: #{tpu_custom_call.1} parent=11 // pred_check
          %p524 = pneg %p139
        $region14: #{tpu_custom_call.1} parent=11 // pred_check_branch
          %526 = sbr.rel (%p524) target = $region16
        $region15: #{tpu_custom_call.1} parent=11 // pred_region
          _
        $region16: #{tpu_custom_call.1} parent=11 // pred_fallthru
          _
        // Predicated region
        $region17: #{tpu_custom_call.1} parent=11 // pred_check
          %p527 = pneg %p160
        $region18: #{tpu_custom_call.1} parent=11 // pred_check_branch
          %529 = sbr.rel (%p527) target = $region20
        $region19: #{tpu_custom_call.1} parent=11 // pred_region
          _
        $region20: #{tpu_custom_call.1} parent=11 // pred_fallthru
          _
        // Predicated region
        $region21: #{tpu_custom_call.1} parent=11 // pred_check
          %p530 = pneg %p181
        $region22: #{tpu_custom_call.1} parent=11 // pred_check_branch
          %532 = sbr.rel (%p530) target = $region24
        $region23: #{tpu_custom_call.1} parent=11 // pred_region
          %534 = vsyncadd [#allocation4], 0
          %s535 = sshll.u32 %s5, 4
          %s536 = int_to_ptr.hbm [resolvable:$true] %s535
          %s537 = sshll.u32 [#allocation3], 4
          %s538 = int_to_ptr.vmem [resolvable:$true] %s537
          %543 = dma.hbm_to_vmem [thread:$0]  %s536, 512, %s538, [#allocation4], 128, 128, 8
        $region24: #{tpu_custom_call.1} parent=11 // pred_fallthru
          _
        // Predicated region
        $region25: #{tpu_custom_call.1} parent=11 // pred_check
          %p544 = pneg %p462
        $region26: #{tpu_custom_call.1} parent=11 // pred_check_branch
          %546 = sbr.rel (%p544) target = $region28
        $region27: #{tpu_custom_call.1} parent=11 // pred_region
          _
        $region28: #{tpu_custom_call.1} parent=11 // pred_fallthru
          _
        // Predicated region
        $region29: #{tpu_custom_call.1} parent=11 // pred_check
          %p547 = pneg %p483
        $region30: #{tpu_custom_call.1} parent=11 // pred_check_branch
          %549 = sbr.rel (%p547) target = $region32
        $region31: #{tpu_custom_call.1} parent=11 // pred_region
          _
        $region32: #{tpu_custom_call.1} parent=11 // pred_fallthru
          _
      $region12: #{tpu_custom_call.1} parent=5 // pred_fallthru
        _
      %p550 = scmp.lt.s32.totalorder %s28, 4
      // Predicated region
      $region33: #{tpu_custom_call.1} parent=5 // pred_check
        %p551 = pneg %p550
      $region34: #{tpu_custom_call.1} parent=5 // pred_check_branch
        %553 = sbr.rel (%p551) target = $region36
      $region35: #{tpu_custom_call.1} parent=5 // pred_region
        // Predicated region
        $region37: #{tpu_custom_call.1} parent=35 // pred_check
          %p554 = pneg %p60
        $region38: #{tpu_custom_call.1} parent=35 // pred_check_branch
          %556 = sbr.rel (%p554) target = $region40
        $region39: #{tpu_custom_call.1} parent=35 // pred_region
          %p557 = scmp.lt.s32.totalorder %s35, 1
          %s558 = scalar_select %p557, %s35, 1
          %s559 = scalar_lea.vmem %s0, %s558
        $region40: #{tpu_custom_call.1} parent=35 // pred_fallthru
          _
        // Predicated region
        $region41: #{tpu_custom_call.1} parent=35 // pred_check
          %p560 = pneg %p86
        $region42: #{tpu_custom_call.1} parent=35 // pred_check_branch
          %562 = sbr.rel (%p560) target = $region44
        $region43: #{tpu_custom_call.1} parent=35 // pred_region
          %p563 = scmp.lt.s32.totalorder %s35, 1
          %s564 = scalar_select %p563, %s35, 1
          %s565 = scalar_lea.vmem %s1, %s564
        $region44: #{tpu_custom_call.1} parent=35 // pred_fallthru
          _
        // Predicated region
        $region45: #{tpu_custom_call.1} parent=35 // pred_check
          %p566 = pneg %p112
        $region46: #{tpu_custom_call.1} parent=35 // pred_check_branch
          %568 = sbr.rel (%p566) target = $region48
        $region47: #{tpu_custom_call.1} parent=35 // pred_region
          %p569 = scmp.lt.s32.totalorder %s35, 1
          %s570 = scalar_select %p569, %s35, 1
          %s571 = scalar_lea.vmem %s2, %s570
        $region48: #{tpu_custom_call.1} parent=35 // pred_fallthru
          _
        // Predicated region
        $region49: #{tpu_custom_call.1} parent=35 // pred_check
          %p572 = pneg %p201
        $region50: #{tpu_custom_call.1} parent=35 // pred_check_branch
          %574 = sbr.rel (%p572) target = $region52
        $region51: #{tpu_custom_call.1} parent=35 // pred_region
          %p575 = scmp.lt.s32.totalorder %s36, 1
          %s576 = scalar_select %p575, %s36, 1
          %s577 = scalar_lea.vmem %s6, %s576
        $region52: #{tpu_custom_call.1} parent=35 // pred_fallthru
          _
        // Predicated region
        $region53: #{tpu_custom_call.1} parent=35 // pred_check
          %p578 = pneg %p227
        $region54: #{tpu_custom_call.1} parent=35 // pred_check_branch
          %580 = sbr.rel (%p578) target = $region56
        $region55: #{tpu_custom_call.1} parent=35 // pred_region
          %p581 = scmp.lt.s32.totalorder %s36, 1
          %s582 = scalar_select %p581, %s36, 1
          %s583 = scalar_lea.vmem %s7, %s582
        $region56: #{tpu_custom_call.1} parent=35 // pred_fallthru
          _
        // Predicated region
        $region57: #{tpu_custom_call.1} parent=35 // pred_check
          %p584 = pneg %p253
        $region58: #{tpu_custom_call.1} parent=35 // pred_check_branch
          %586 = sbr.rel (%p584) target = $region60
        $region59: #{tpu_custom_call.1} parent=35 // pred_region
          %p587 = scmp.lt.s32.totalorder %s36, 1
          %s588 = scalar_select %p587, %s36, 1
          %s589 = smul.addr %s588, 4
          %s590 = smul.addr %s589, 8
          %s591 = scalar_lea.vmem %s8, %s590
        $region60: #{tpu_custom_call.1} parent=35 // pred_fallthru
          _
        // Predicated region
        $region61: #{tpu_custom_call.1} parent=35 // pred_check
          %p592 = pneg %p279
        $region62: #{tpu_custom_call.1} parent=35 // pred_check_branch
          %594 = sbr.rel (%p592) target = $region64
        $region63: #{tpu_custom_call.1} parent=35 // pred_region
          %p595 = scmp.lt.s32.totalorder %s36, 1
          %s596 = scalar_select %p595, %s36, 1
          %s597 = scalar_lea.vmem %s9, %s596
        $region64: #{tpu_custom_call.1} parent=35 // pred_fallthru
          _
        // Predicated region
        $region65: #{tpu_custom_call.1} parent=35 // pred_check
          %p598 = pneg %p305
        $region66: #{tpu_custom_call.1} parent=35 // pred_check_branch
          %600 = sbr.rel (%p598) target = $region68
        $region67: #{tpu_custom_call.1} parent=35 // pred_region
          %p601 = scmp.lt.s32.totalorder %s36, 1
          %s602 = scalar_select %p601, %s36, 1
          %s603 = smul.addr %s602, 4
          %s604 = smul.addr %s603, 8
          %s605 = scalar_lea.vmem %s10, %s604
        $region68: #{tpu_custom_call.1} parent=35 // pred_fallthru
          _
        // Predicated region
        $region69: #{tpu_custom_call.1} parent=35 // pred_check
          %p606 = pneg %p331
        $region70: #{tpu_custom_call.1} parent=35 // pred_check_branch
          %608 = sbr.rel (%p606) target = $region72
        $region71: #{tpu_custom_call.1} parent=35 // pred_region
          %p609 = scmp.lt.s32.totalorder %s36, 1
          %s610 = scalar_select %p609, %s36, 1
          %s611 = scalar_lea.vmem %s11, %s610
        $region72: #{tpu_custom_call.1} parent=35 // pred_fallthru
          _
        // Predicated region
        $region73: #{tpu_custom_call.1} parent=35 // pred_check
          %p612 = pneg %p357
        $region74: #{tpu_custom_call.1} parent=35 // pred_check_branch
          %614 = sbr.rel (%p612) target = $region76
        $region75: #{tpu_custom_call.1} parent=35 // pred_region
          %p615 = scmp.lt.s32.totalorder %s36, 1
          %s616 = scalar_select %p615, %s36, 1
          %s617 = smul.addr %s616, 4
          %s618 = smul.addr %s617, 8
          %s619 = scalar_lea.vmem %s12, %s618
        $region76: #{tpu_custom_call.1} parent=35 // pred_fallthru
          _
        // Predicated region
        $region77: #{tpu_custom_call.1} parent=35 // pred_check
          %p620 = pneg %p383
        $region78: #{tpu_custom_call.1} parent=35 // pred_check_branch
          %622 = sbr.rel (%p620) target = $region80
        $region79: #{tpu_custom_call.1} parent=35 // pred_region
          %p623 = scmp.lt.s32.totalorder %s36, 1
          %s624 = scalar_select %p623, %s36, 1
          %s625 = scalar_lea.vmem %s13, %s624
        $region80: #{tpu_custom_call.1} parent=35 // pred_fallthru
          _
        // Predicated region
        $region81: #{tpu_custom_call.1} parent=35 // pred_check
          %p626 = pneg %p409
        $region82: #{tpu_custom_call.1} parent=35 // pred_check_branch
          %628 = sbr.rel (%p626) target = $region84
        $region83: #{tpu_custom_call.1} parent=35 // pred_region
          %p629 = scmp.lt.s32.totalorder %s36, 1
          %s630 = scalar_select %p629, %s36, 1
          %s631 = smul.addr %s630, 8
          %s632 = smul.addr %s631, 8
          %s633 = scalar_lea.vmem %s14, %s632
        $region84: #{tpu_custom_call.1} parent=35 // pred_fallthru
          _
        // Predicated region
        $region85: #{tpu_custom_call.1} parent=35 // pred_check
          %p634 = pneg %p435
        $region86: #{tpu_custom_call.1} parent=35 // pred_check_branch
          %636 = sbr.rel (%p634) target = $region88
        $region87: #{tpu_custom_call.1} parent=35 // pred_region
          %p637 = scmp.lt.s32.totalorder %s36, 1
          %s638 = scalar_select %p637, %s36, 1
          %s639 = scalar_lea.vmem %s15, %s638
        $region88: #{tpu_custom_call.1} parent=35 // pred_fallthru
          _
      $region36: #{tpu_custom_call.1} parent=5 // pred_fallthru
        _
      %p640 = scmp.le.s32.totalorder 1, %s28
      %p641 = scmp.lt.s32.totalorder %s28, 5
      %p642 = pnand %p640, %p641
      %p643 = pneg %p642
      // Predicated region
      $region89: #{tpu_custom_call.1} parent=5 // pred_check
        _
      $region90: #{tpu_custom_call.1} parent=5 // pred_check_branch
        %645 = sbr.rel (%p642) target = $region92
      $region91: #{tpu_custom_call.1} parent=5 // pred_region
        %s646 = ssub.s32 %s28, 1
        // Predicated region
        $region93: #{tpu_custom_call.1} parent=91 // pred_check
          %p647 = pneg %p181
        $region94: #{tpu_custom_call.1} parent=91 // pred_check_branch
          %649 = sbr.rel (%p647) target = $region96
        $region95: #{tpu_custom_call.1} parent=91 // pred_region
          %651 = dma.done [#allocation4], 512
        $region96: #{tpu_custom_call.1} parent=91 // pred_fallthru
          _
        %p652 = scmp.lt.s32.totalorder %s37, 1
        %s653 = scalar_select %p652, %s37, 1
        %s654 = scalar_lea.vmem %s0, %s653
        %p655 = pneg %p66
        %p656 = pneg %p63
        %p657 = scmp.lt.s32.totalorder %s37, 1
        %s658 = scalar_select %p657, %s37, 1
        %s659 = scalar_lea.vmem %s1, %s658
        %p660 = pneg %p92
        %p661 = pneg %p89
        %p662 = scmp.lt.s32.totalorder %s37, 1
        %s663 = scalar_select %p662, %s37, 1
        %s664 = scalar_lea.vmem %s2, %s663
        %p665 = pneg %p118
        %p666 = pneg %p115
        %p667 = pneg %p139
        %p668 = pneg %p136
        %p669 = pneg %p160
        %p670 = pneg %p157
        %p671 = pneg %p181
        %p672 = pneg %p178
        %p673 = scmp.lt.s32.totalorder %s38, 1
        %s674 = scalar_select %p673, %s38, 1
        %s675 = scalar_lea.vmem %s6, %s674
        %p676 = pneg %p207
        %p677 = pneg %p204
        %p678 = scmp.lt.s32.totalorder %s38, 1
        %s679 = scalar_select %p678, %s38, 1
        %s680 = scalar_lea.vmem %s7, %s679
        %p681 = pneg %p233
        %p682 = pneg %p230
        %p683 = scmp.lt.s32.totalorder %s38, 1
        %s684 = scalar_select %p683, %s38, 1
        %s685 = smul.addr %s684, 4
        %s686 = smul.addr %s685, 8
        %s687 = scalar_lea.vmem %s8, %s686
        %p688 = pneg %p259
        %p689 = pneg %p256
        %p690 = scmp.lt.s32.totalorder %s38, 1
        %s691 = scalar_select %p690, %s38, 1
        %s692 = scalar_lea.vmem %s9, %s691
        %p693 = pneg %p285
        %p694 = pneg %p282
        %p695 = scmp.lt.s32.totalorder %s38, 1
        %s696 = scalar_select %p695, %s38, 1
        %s697 = smul.addr %s696, 4
        %s698 = smul.addr %s697, 8
        %s699 = scalar_lea.vmem %s10, %s698
        %p700 = pneg %p311
        %p701 = pneg %p308
        %p702 = scmp.lt.s32.totalorder %s38, 1
        %s703 = scalar_select %p702, %s38, 1
        %s704 = scalar_lea.vmem %s11, %s703
        %p705 = pneg %p337
        %p706 = pneg %p334
        %p707 = scmp.lt.s32.totalorder %s38, 1
        %s708 = scalar_select %p707, %s38, 1
        %s709 = smul.addr %s708, 4
        %s710 = smul.addr %s709, 8
        %s711 = scalar_lea.vmem %s12, %s710
        %p712 = pneg %p363
        %p713 = pneg %p360
        %p714 = scmp.lt.s32.totalorder %s38, 1
        %s715 = scalar_select %p714, %s38, 1
        %s716 = scalar_lea.vmem %s13, %s715
        %p717 = pneg %p389
        %p718 = pneg %p386
        %p719 = scmp.lt.s32.totalorder %s38, 1
        %s720 = scalar_select %p719, %s38, 1
        %s721 = smul.addr %s720, 8
        %s722 = smul.addr %s721, 8
        %s723 = scalar_lea.vmem %s14, %s722
        %p724 = pneg %p415
        %p725 = pneg %p412
        %p726 = scmp.lt.s32.totalorder %s38, 1
        %s727 = scalar_select %p726, %s38, 1
        %s728 = scalar_lea.vmem %s15, %s727
        %p729 = pneg %p441
        %p730 = pneg %p438
        %p731 = pneg %p462
        %p732 = pneg %p459
        %p733 = pneg %p483
        %p734 = pneg %p480
        %p735 = pneg %p509
        %p736 = pneg %p506
        %s737 = sand.u32 %s496, 1
        %s738 = scalar_lea.sflag [#allocation5], %s737
        %s739 = sand.u32 %s496, 1
        %s740 = smul.addr %s739, 8
        %s741 = scalar_lea.vmem [#allocation6], %s740
        %p742 = scmp.lt.s32.totalorder %s37, 1
        %s743 = scalar_select %p742, %s37, 1
        %s744 = scalar_lea.vmem %s0, %s743
        %p745 = scmp.lt.s32.totalorder %s37, 1
        %s746 = scalar_select %p745, %s37, 1
        %s747 = scalar_lea.vmem %s1, %s746
        %p748 = scmp.lt.s32.totalorder %s37, 1
        %s749 = scalar_select %p748, %s37, 1
        %s750 = scalar_lea.vmem %s2, %s749
        %p751 = scmp.lt.s32.totalorder %s38, 1
        %s752 = scalar_select %p751, %s38, 1
        %s753 = scalar_lea.vmem %s6, %s752
        %p754 = scmp.lt.s32.totalorder %s38, 1
        %s755 = scalar_select %p754, %s38, 1
        %s756 = scalar_lea.vmem %s7, %s755
        %p757 = scmp.lt.s32.totalorder %s38, 1
        %s758 = scalar_select %p757, %s38, 1
        %s759 = smul.addr %s758, 4
        %s760 = smul.addr %s759, 8
        %s761 = scalar_lea.vmem %s8, %s760
        %p762 = scmp.lt.s32.totalorder %s38, 1
        %s763 = scalar_select %p762, %s38, 1
        %s764 = scalar_lea.vmem %s9, %s763
        %p765 = scmp.lt.s32.totalorder %s38, 1
        %s766 = scalar_select %p765, %s38, 1
        %s767 = smul.addr %s766, 4
        %s768 = smul.addr %s767, 8
        %s769 = scalar_lea.vmem %s10, %s768
        %p770 = scmp.lt.s32.totalorder %s38, 1
        %s771 = scalar_select %p770, %s38, 1
        %s772 = scalar_lea.vmem %s11, %s771
        %p773 = scmp.lt.s32.totalorder %s38, 1
        %s774 = scalar_select %p773, %s38, 1
        %s775 = smul.addr %s774, 4
        %s776 = smul.addr %s775, 8
        %s777 = scalar_lea.vmem %s12, %s776
        %p778 = scmp.lt.s32.totalorder %s38, 1
        %s779 = scalar_select %p778, %s38, 1
        %s780 = scalar_lea.vmem %s13, %s779
        %p781 = scmp.lt.s32.totalorder %s38, 1
        %s782 = scalar_select %p781, %s38, 1
        %s783 = smul.addr %s782, 8
        %s784 = smul.addr %s783, 8
        %s785 = scalar_lea.vmem %s14, %s784
        %p786 = scmp.lt.s32.totalorder %s38, 1
        %s787 = scalar_select %p786, %s38, 1
        %s788 = scalar_lea.vmem %s15, %s787
        %p789 = scmp.eq.s32.totalorder %s38, 0
        // Predicated region
        $region97: #{tpu_custom_call.1} parent=91 // pred_check
          %p790 = pneg %p789
        $region98: #{tpu_custom_call.1} parent=91 // pred_check_branch
          %792 = sbr.rel (%p790) target = $region100
        $region99: #{tpu_custom_call.1} parent=91 // pred_region
          %v793 = vld [vmem:[%s744] sm:$0x1]
          %v794 = vperm.slane %v793, 0
          %v795 = vlaneseq
          %v796 = vshrl.u32 %v795, 7
          %798 = vset.pattern.permute.xlu0 %v796
          %799 = vperm.xlu0 %798, %v794
          %v800 = vpop.permute.xlu0 %799
          %v801 = vld [vmem:[%s747] sm:$0x1]
          %v802 = vperm.slane %v801, 0
          %v803 = vlaneseq
          %v804 = vshrl.u32 %v803, 7
          %806 = vset.pattern.permute.xlu0 %v804
          %807 = vperm.xlu0 %806, %v802
          %v808 = vpop.permute.xlu0 %807
          %v809 = vadd.s32 %v808, 50
          %v810 = vlaneseq
          %v811 = vand.u32 %v810, 127
          %vm812 = vcmp.eq.s32.totalorder %v811, %v800
          %vm813 = vcmp.eq.s32.totalorder %v811, %v809
          %vm814 = vmor %vm812, %vm813
          %v815 = vsel %vm814, 1, 0
          %v816 = vcvt.s32.f32 %v815
          %v817 = vld [vmem:[%s3] sm:$0xff]
          %v818 = vld [vmem:[%s3 + $0x8] sm:$0xff]
          %v819 = vld [vmem:[%s3 + $0x10] sm:$0xff]
          %v820 = vld [vmem:[%s3 + $0x18] sm:$0xff]
          %v821 = vld [vmem:[%s3 + $0x20] sm:$0xff]
          %v822 = vld [vmem:[%s3 + $0x28] sm:$0xff]
          %v823 = vld [vmem:[%s3 + $0x30] sm:$0xff]
          %v824 = vld [vmem:[%s3 + $0x38] sm:$0xff]
          %v825 = vld [vmem:[%s3 + $0x40] sm:$0x7]
          %vm826 = vcmask 547840
          %v828 = vsel %vm826, %v816, 0
          %vm830 = vcmask 1042432
          %v832 = vsel %vm830, %v825, 0
          %834 = vmatpush.msra.mxu0 0.0
          %835 = vmatpush.msra.mxu0 0.0
          %836 = vmatpush.msra.mxu0 0.0
          %837 = vmatpush.msra.mxu0 0.0
          %838 = vmatpush.msra.mxu0 0.0
          %839 = vmatpush.msra.mxu0 0.0
          %840 = vmatpush.msra.mxu0 0.0
          %841 = vmatpush.msra.mxu0 %v832
          %842 = vmatpush.msra.mxu0 %v824
          %843 = vmatpush.msra.mxu0 %v823
          %844 = vmatpush.msra.mxu0 %v822
          %845 = vmatpush.msra.mxu0 %v821
          %846 = vmatpush.msra.mxu0 %v820
          %847 = vmatpush.msra.mxu0 %v819
          %848 = vmatpush.msra.mxu0 %v818
          %849 = vmatpush.msra.mxu0 %v817
          %850 = vmatmul.f32.gmra.mxu0 %v828
          %v851 = vpop.f32.mrf.mxu0
          %v852 = vadd.f32 0.0, %v851
          %853 = vdwg.mxu0
          %vm854 = vcmask 261120
          %855 = vst.msk [vmem:[#allocation2] sm:$0xff] %vm854, %v852
        $region100: #{tpu_custom_call.1} parent=91 // pred_fallthru
          _
        %v856 = vld [vmem:[#allocation2] sm:$0xff]
        %v857 = vld [vmem:[%s753] sm:$0x1]
        %v858 = vld [vmem:[%s756] sm:$0x1]
        %vm859 = vcmask 261120
        %v860 = vsel %vm859, %v856, 0.0
        %861 = vadd.xlane.f32.xlu0 %v860
        %v862 = vpop.xlane.xlu0 %861
        %v863 = vrcp.pop 32.0
        %v864 = vmul.f32 32.0, %v863
        %v865 = vsub.f32 1.0, %v864
        %v866 = vmul.f32 %v863, %v865
        %v867 = vadd.f32 %v863, %v866
        %vm868 = vweird.f32 %v863
        %v869 = vsel %vm868, %v863, %v867
        %v870 = vmul.f32 %v862, %v869
        %v871 = vsub.f32 %v856, %v870
        %v872 = vmul.f32 %v871, %v871
        %v873 = vsel %vm859, %v872, 0.0
        %874 = vadd.xlane.f32.xlu0 %v873
        %v875 = vpop.xlane.xlu0 %874
        %v876 = vmul.f32 %v875, %v869
        %v877 = vadd.f32 %v876, 1e-06
        %v878 = vrsqrt.pop %v877
        %v879 = vmul.f32 %v878, %v877
        %v880 = vmul.f32 %v879, %v878
        %v881 = vmul.f32 0.5, %v880
        %v882 = vsub.f32 1.5, %v881
        %v883 = vmul.f32 %v878, %v882
        %vm884 = vweird.f32 %v877
        %vm885 = vweird.f32 %v878
        %vm886 = vmor %vm884, %vm885
        %v887 = vsel %vm886, %v878, %v883
        %v888 = vmul.f32 %v871, %v887
        %v890 = vperm.slane %v857, 0
        %v892 = vmul.f32 %v888, %v890
        %v894 = vperm.slane %v858, 0
        %v896 = vadd.f32 %v892, %v894
        %v897 = vld [vmem:[%s761] sm:$0xff]
        %v898 = vld [vmem:[%s761 + $0x8] sm:$0xff]
        %v899 = vld [vmem:[%s761 + $0x10] sm:$0xff]
        %v900 = vld [vmem:[%s761 + $0x18] sm:$0xff]
        %v901 = vld [vmem:[%s764] sm:$0x1]
        %v903 = vperm.slane %v901, 0
        %v906 = vsel %vm859, %v896, 0
        %908 = vmatpush.msra.mxu0 0.0
        %909 = vmatpush.msra.mxu0 0.0
        %910 = vmatpush.msra.mxu0 0.0
        %911 = vmatpush.msra.mxu0 0.0
        %912 = vmatpush.msra.mxu0 0.0
        %913 = vmatpush.msra.mxu0 0.0
        %914 = vmatpush.msra.mxu0 0.0
        %915 = vmatpush.msra.mxu0 0.0
        %916 = vmatpush.msra.mxu0 0.0
        %917 = vmatpush.msra.mxu0 0.0
        %918 = vmatpush.msra.mxu0 0.0
        %919 = vmatpush.msra.mxu0 0.0
        %920 = vmatpush.msra.mxu0 %v900
        %921 = vmatpush.msra.mxu0 %v899
        %922 = vmatpush.msra.mxu0 %v898
        %923 = vmatpush.msra.mxu0 %v897
        %924 = vmatmul.f32.gmra.mxu0 %v906
        %v925 = vpop.f32.mrf.mxu0
        %v926 = vadd.f32 %v903, %v925
        %927 = vdwg.mxu0
        %v928 = vld [vmem:[%s4] sm:$0xff]
        %v929 = vld [vmem:[%s4 + $0x8] sm:$0xff]
        %v930 = vld [vmem:[%s4 + $0x10] sm:$0xff]
        %v931 = vld [vmem:[%s4 + $0x18] sm:$0xff]
        %936 = vrot.lane.b32.xlu0 %v928, 32
        %v937 = vpop.permute.xlu0 %936
        %938 = vrot.lane.b32.xlu0 %v929, 32
        %v939 = vpop.permute.xlu0 %938
        %940 = vrot.lane.b32.xlu0 %v930, 32
        %v941 = vpop.permute.xlu0 %940
        %942 = vrot.lane.b32.xlu0 %v931, 32
        %v943 = vpop.permute.xlu0 %942
        %v948 = vmul.f32 %v926, %v937
        %v949 = vmul.f32 %v926, %v939
        %v950 = vmul.f32 %v926, %v941
        %v951 = vmul.f32 %v926, %v943
        %952 = vrot.lane.b32.xlu0 %v928, 64
        %v953 = vpop.permute.xlu0 %952
        %954 = vrot.lane.b32.xlu0 %v929, 64
        %v955 = vpop.permute.xlu0 %954
        %956 = vrot.lane.b32.xlu0 %v930, 64
        %v957 = vpop.permute.xlu0 %956
        %958 = vrot.lane.b32.xlu0 %v931, 64
        %v959 = vpop.permute.xlu0 %958
        %v964 = vmul.f32 %v926, %v953
        %v965 = vmul.f32 %v926, %v955
        %v966 = vmul.f32 %v926, %v957
        %v967 = vmul.f32 %v926, %v959
        %972 = vrot.lane.b32.xlu0 %v948, 96
        %v973 = vpop.permute.xlu0 %972
        %974 = vrot.lane.b32.xlu0 %v949, 96
        %v975 = vpop.permute.xlu0 %974
        %976 = vrot.lane.b32.xlu0 %v950, 96
        %v977 = vpop.permute.xlu0 %976
        %978 = vrot.lane.b32.xlu0 %v951, 96
        %v979 = vpop.permute.xlu0 %978
        %v981 = vsel %vm859, %v926, 0
        %v983 = vsel %vm859, %v973, 0
        %v985 = vsel %vm859, %v975, 0
        %v987 = vsel %vm859, %v977, 0
        %v989 = vsel %vm859, %v979, 0
        %991 = vmatpush.xpose.msra.mxu0 0.0
        %992 = vmatpush.xpose.msra.mxu0 0.0
        %993 = vmatpush.xpose.msra.mxu0 0.0
        %994 = vmatpush.xpose.msra.mxu0 0.0
        %995 = vmatpush.xpose.msra.mxu0 0.0
        %996 = vmatpush.xpose.msra.mxu0 0.0
        %997 = vmatpush.xpose.msra.mxu0 0.0
        %998 = vmatpush.xpose.msra.mxu0 0.0
        %999 = vmatpush.xpose.msra.mxu0 0.0
        %1000 = vmatpush.xpose.msra.mxu0 0.0
        %1001 = vmatpush.xpose.msra.mxu0 0.0
        %1002 = vmatpush.xpose.msra.mxu0 0.0
        %1003 = vmatpush.xpose.msra.mxu0 %v989
        %1004 = vmatpush.xpose.msra.mxu0 %v987
        %1005 = vmatpush.xpose.msra.mxu0 %v985
        %1006 = vmatpush.xpose.msra.mxu0 %v983
        %1007 = vmatmul.f32.gmra.mxu0 %v981
        %v1008 = vpop.f32.mrf.mxu0
        %v1009 = vadd.f32 0.0, %v1008
        %1010 = vdwg.mxu0
        %v1011 = vmul.f32 %v1009, 0.35355338
        %v1012 = vld [vmem:[%s750] sm:$0x1]
        %v1014 = vperm.slane %v1012, 0
        %v1016 = vadd.f32 %v1011, %v1014
        %v1017 = vsel %vm859, %v1016, -inf
        %1018 = vmax.xlane.f32.xlu0 %v1017
        %v1019 = vpop.xlane.xlu0 %1018
        %v1020 = vsub.f32 %v1016, %v1019
        %v1021 = vmul.f32 %v1020, 1.442695
        %v1022 = vpow.pop %v1021
        %v1023 = vld [vmem:[#allocation3] sm:$0xff]
        %v1024 = vld [vmem:[#allocation3 + $0x8] sm:$0xff]
        %v1025 = vld [vmem:[#allocation3 + $0x10] sm:$0xff]
        %v1026 = vld [vmem:[#allocation3 + $0x18] sm:$0xff]
        %v1028 = vsel %vm859, %v1022, 0
        %1030 = vmatpush.msra.mxu0 0.0
        %1031 = vmatpush.msra.mxu0 0.0
        %1032 = vmatpush.msra.mxu0 0.0
        %1033 = vmatpush.msra.mxu0 0.0
        %1034 = vmatpush.msra.mxu0 0.0
        %1035 = vmatpush.msra.mxu0 0.0
        %1036 = vmatpush.msra.mxu0 0.0
        %1037 = vmatpush.msra.mxu0 0.0
        %1038 = vmatpush.msra.mxu0 0.0
        %1039 = vmatpush.msra.mxu0 0.0
        %1040 = vmatpush.msra.mxu0 0.0
        %1041 = vmatpush.msra.mxu0 0.0
        %1042 = vmatpush.msra.mxu0 %v1026
        %1043 = vmatpush.msra.mxu0 %v1025
        %1044 = vmatpush.msra.mxu0 %v1024
        %1045 = vmatpush.msra.mxu0 %v1023
        %1046 = vmatmul.f32.gmra.mxu0 %v1028
        %v1047 = vpop.f32.mrf.mxu0
        %v1048 = vadd.f32 0.0, %v1047
        %1049 = vdwg.mxu0
        %v1050 = vrcp.pop %v1048
        %v1051 = vmul.f32 %v1048, %v1050
        %v1052 = vsub.f32 1.0, %v1051
        %v1053 = vmul.f32 %v1050, %v1052
        %v1054 = vadd.f32 %v1050, %v1053
        %vm1055 = vweird.f32 %v1048
        %vm1056 = vweird.f32 %v1050
        %vm1057 = vmor %vm1055, %vm1056
        %v1058 = vsel %vm1057, %v1050, %v1054
        %v1059 = vand.u32 2147483647, %v1048
        %vm1060 = vcmp.eq.f32.partialorder %v1059, 8.507059e+37
        %v1061 = vand.u32 %v1048, 2147483648
        %v1062 = vor.u32 1.1754944e-38, %v1061
        %v1063 = vsel %vm1060, %v1062, %v1058
        %v1064 = vmul.f32 %v1022, %v1063
        %1069 = vrot.lane.b32.xlu0 %v964, 64
        %v1070 = vpop.permute.xlu0 %1069
        %1071 = vrot.lane.b32.xlu0 %v965, 64
        %v1072 = vpop.permute.xlu0 %1071
        %1073 = vrot.lane.b32.xlu0 %v966, 64
        %v1074 = vpop.permute.xlu0 %1073
        %1075 = vrot.lane.b32.xlu0 %v967, 64
        %v1076 = vpop.permute.xlu0 %1075
        %v1082 = vsel %vm859, %v1064, 0
        %1084 = vmatpush.msra.mxu0 0.0
        %1085 = vmatpush.msra.mxu0 0.0
        %1086 = vmatpush.msra.mxu0 0.0
        %1087 = vmatpush.msra.mxu0 0.0
        %1088 = vmatpush.msra.mxu0 0.0
        %1089 = vmatpush.msra.mxu0 0.0
        %1090 = vmatpush.msra.mxu0 0.0
        %1091 = vmatpush.msra.mxu0 0.0
        %1092 = vmatpush.msra.mxu0 0.0
        %1093 = vmatpush.msra.mxu0 0.0
        %1094 = vmatpush.msra.mxu0 0.0
        %1095 = vmatpush.msra.mxu0 0.0
        %1096 = vmatpush.msra.mxu0 %v1076
        %1097 = vmatpush.msra.mxu0 %v1074
        %1098 = vmatpush.msra.mxu0 %v1072
        %1099 = vmatpush.msra.mxu0 %v1070
        %1100 = vmatmul.f32.gmra.mxu0 %v1082
        %v1101 = vpop.f32.mrf.mxu0
        %v1102 = vadd.f32 0.0, %v1101
        %1103 = vdwg.mxu0
        %v1104 = vld [vmem:[%s769] sm:$0xff]
        %v1105 = vld [vmem:[%s769 + $0x8] sm:$0xff]
        %v1106 = vld [vmem:[%s769 + $0x10] sm:$0xff]
        %v1107 = vld [vmem:[%s769 + $0x18] sm:$0xff]
        %v1108 = vld [vmem:[%s772] sm:$0x1]
        %v1110 = vperm.slane %v1108, 0
        %v1113 = vsel %vm859, %v1102, 0
        %1115 = vmatpush.msra.mxu0 0.0
        %1116 = vmatpush.msra.mxu0 0.0
        %1117 = vmatpush.msra.mxu0 0.0
        %1118 = vmatpush.msra.mxu0 0.0
        %1119 = vmatpush.msra.mxu0 0.0
        %1120 = vmatpush.msra.mxu0 0.0
        %1121 = vmatpush.msra.mxu0 0.0
        %1122 = vmatpush.msra.mxu0 0.0
        %1123 = vmatpush.msra.mxu0 0.0
        %1124 = vmatpush.msra.mxu0 0.0
        %1125 = vmatpush.msra.mxu0 0.0
        %1126 = vmatpush.msra.mxu0 0.0
        %1127 = vmatpush.msra.mxu0 %v1107
        %1128 = vmatpush.msra.mxu0 %v1106
        %1129 = vmatpush.msra.mxu0 %v1105
        %1130 = vmatpush.msra.mxu0 %v1104
        %1131 = vmatmul.f32.gmra.mxu0 %v1113
        %v1132 = vpop.f32.mrf.mxu0
        %v1133 = vadd.f32 %v1110, %v1132
        %1134 = vdwg.mxu0
        %v1135 = vadd.f32 %v856, %v1133
        %v1136 = vsel %vm859, %v1135, 0.0
        %1137 = vadd.xlane.f32.xlu0 %v1136
        %v1138 = vpop.xlane.xlu0 %1137
        %v1139 = vmul.f32 %v1138, %v869
        %v1140 = vsub.f32 %v1135, %v1139
        %v1141 = vmul.f32 %v1140, %v1140
        %v1142 = vsel %vm859, %v1141, 0.0
        %1143 = vadd.xlane.f32.xlu0 %v1142
        %v1144 = vpop.xlane.xlu0 %1143
        %v1145 = vmul.f32 %v1144, %v869
        %v1146 = vadd.f32 %v1145, 1e-06
        %v1147 = vrsqrt.pop %v1146
        %v1148 = vmul.f32 %v1147, %v1146
        %v1149 = vmul.f32 %v1148, %v1147
        %v1150 = vmul.f32 0.5, %v1149
        %v1151 = vsub.f32 1.5, %v1150
        %v1152 = vmul.f32 %v1147, %v1151
        %vm1153 = vweird.f32 %v1146
        %vm1154 = vweird.f32 %v1147
        %vm1155 = vmor %vm1153, %vm1154
        %v1156 = vsel %vm1155, %v1147, %v1152
        %v1157 = vmul.f32 %v1140, %v1156
        %v1158 = vmul.f32 %v1157, %v890
        %v1159 = vadd.f32 %v1158, %v894
        %v1160 = vld [vmem:[%s777] sm:$0xff]
        %v1161 = vld [vmem:[%s777 + $0x8] sm:$0xff]
        %v1162 = vld [vmem:[%s777 + $0x10] sm:$0xff]
        %v1163 = vld [vmem:[%s777 + $0x18] sm:$0xff]
        %v1164 = vld [vmem:[%s780] sm:$0x1]
        %v1166 = vperm.slane %v1164, 0
        %v1169 = vsel %vm859, %v1159, 0
        %1171 = vmatpush.msra.mxu0 0.0
        %1172 = vmatpush.msra.mxu0 0.0
        %1173 = vmatpush.msra.mxu0 0.0
        %1174 = vmatpush.msra.mxu0 0.0
        %1175 = vmatpush.msra.mxu0 0.0
        %1176 = vmatpush.msra.mxu0 0.0
        %1177 = vmatpush.msra.mxu0 0.0
        %1178 = vmatpush.msra.mxu0 0.0
        %1179 = vmatpush.msra.mxu0 0.0
        %1180 = vmatpush.msra.mxu0 0.0
        %1181 = vmatpush.msra.mxu0 0.0
        %1182 = vmatpush.msra.mxu0 0.0
        %1183 = vmatpush.msra.mxu0 %v1163
        %1184 = vmatpush.msra.mxu0 %v1162
        %1185 = vmatpush.msra.mxu0 %v1161
        %1186 = vmatpush.msra.mxu0 %v1160
        %1187 = vmatmul.f32.gmra.mxu0 %v1169
        %v1188 = vpop.f32.mrf.mxu0
        %v1189 = vadd.f32 %v1166, %v1188
        %1190 = vdwg.mxu0
        %v1191 = vmax.f32 %v1189, 0.0
        %v1192 = vld [vmem:[%s785] sm:$0xff]
        %v1193 = vld [vmem:[%s785 + $0x8] sm:$0xff]
        %v1194 = vld [vmem:[%s785 + $0x10] sm:$0xff]
        %v1195 = vld [vmem:[%s785 + $0x18] sm:$0xff]
        %v1196 = vld [vmem:[%s785 + $0x20] sm:$0xff]
        %v1197 = vld [vmem:[%s785 + $0x28] sm:$0xff]
        %v1198 = vld [vmem:[%s785 + $0x30] sm:$0xff]
        %v1199 = vld [vmem:[%s785 + $0x38] sm:$0xff]
        %v1200 = vld [vmem:[%s788] sm:$0x1]
        %v1202 = vperm.slane %v1200, 0
        %vm1204 = vcmask 523264
        %v1206 = vsel %vm1204, %v1191, 0
        %1208 = vmatpush.msra.mxu0 0.0
        %1209 = vmatpush.msra.mxu0 0.0
        %1210 = vmatpush.msra.mxu0 0.0
        %1211 = vmatpush.msra.mxu0 0.0
        %1212 = vmatpush.msra.mxu0 0.0
        %1213 = vmatpush.msra.mxu0 0.0
        %1214 = vmatpush.msra.mxu0 0.0
        %1215 = vmatpush.msra.mxu0 0.0
        %1216 = vmatpush.msra.mxu0 %v1199
        %1217 = vmatpush.msra.mxu0 %v1198
        %1218 = vmatpush.msra.mxu0 %v1197
        %1219 = vmatpush.msra.mxu0 %v1196
        %1220 = vmatpush.msra.mxu0 %v1195
        %1221 = vmatpush.msra.mxu0 %v1194
        %1222 = vmatpush.msra.mxu0 %v1193
        %1223 = vmatpush.msra.mxu0 %v1192
        %1224 = vmatmul.f32.gmra.mxu0 %v1206
        %v1225 = vpop.f32.mrf.mxu0
        %v1226 = vadd.f32 %v1202, %v1225
        %1227 = vdwg.mxu0
        %v1228 = vadd.f32 %v1135, %v1226
        %1229 = vst.msk [vmem:[#allocation2] sm:$0xff] %vm859, %v1228
        %p1230 = scmp.eq.s32.totalorder %s38, 1
        // Predicated region
        $region101: #{tpu_custom_call.1} parent=91 // pred_check
          %p1231 = pneg %p1230
        $region102: #{tpu_custom_call.1} parent=91 // pred_check_branch
          %1233 = sbr.rel (%p1231) target = $region104
        $region103: #{tpu_custom_call.1} parent=91 // pred_region
          %v1234 = vld [vmem:[%s16] sm:$0x1]
          %v1235 = vld [vmem:[%s17] sm:$0x1]
          %v1236 = vsel %vm859, %v1228, 0.0
          %1237 = vadd.xlane.f32.xlu0 %v1236
          %v1238 = vpop.xlane.xlu0 %1237
          %v1239 = vmul.f32 %v1238, %v869
          %v1240 = vsub.f32 %v1228, %v1239
          %v1241 = vmul.f32 %v1240, %v1240
          %v1242 = vsel %vm859, %v1241, 0.0
          %1243 = vadd.xlane.f32.xlu0 %v1242
          %v1244 = vpop.xlane.xlu0 %1243
          %v1245 = vmul.f32 %v1244, %v869
          %v1246 = vadd.f32 %v1245, 1e-06
          %v1247 = vrsqrt.pop %v1246
          %v1248 = vmul.f32 %v1247, %v1246
          %v1249 = vmul.f32 %v1248, %v1247
          %v1250 = vmul.f32 0.5, %v1249
          %v1251 = vsub.f32 1.5, %v1250
          %v1252 = vmul.f32 %v1247, %v1251
          %vm1253 = vweird.f32 %v1246
          %vm1254 = vweird.f32 %v1247
          %vm1255 = vmor %vm1253, %vm1254
          %v1256 = vsel %vm1255, %v1247, %v1252
          %v1257 = vmul.f32 %v1240, %v1256
          %v1259 = vperm.slane %v1234, 0
          %v1261 = vmul.f32 %v1257, %v1259
          %v1263 = vperm.slane %v1235, 0
          %v1265 = vadd.f32 %v1261, %v1263
          %1266 = vst.msk [vmem:[%s741] sm:$0xff] %vm859, %v1265
        $region104: #{tpu_custom_call.1} parent=91 // pred_fallthru
          _
        %s1267 = sand.u32 %s496, 1
        %s1268 = scalar_lea.sflag [#allocation5], %s1267
        %s1269 = sand.u32 %s496, 1
        %s1270 = smul.addr %s1269, 8
        %s1271 = scalar_lea.vmem [#allocation6], %s1270
        // Predicated region
        $region105: #{tpu_custom_call.1} parent=91 // pred_check
          %p1272 = pneg %p506
        $region106: #{tpu_custom_call.1} parent=91 // pred_check_branch
          %1274 = sbr.rel (%p1272) target = $region108
        $region107: #{tpu_custom_call.1} parent=91 // pred_region
          %1276 = vsyncadd %s1268, 0
          %s1277 = smul.addr %s37, 8
          %s1278 = scalar_lea.hbm %s18, %s1277
          %s1280 = sshll.u32 %s1271, 4
          %s1281 = int_to_ptr.vmem [resolvable:$true] %s1280
          %s1282 = sshll.u32 %s1278, 4
          %s1283 = int_to_ptr.hbm [resolvable:$true] %s1282
          %1285 = dma.vmem_to_hbm [thread:$0]  %s1281, 128, %s1283, %s1268
        $region108: #{tpu_custom_call.1} parent=91 // pred_fallthru
          _
      $region92: #{tpu_custom_call.1} parent=5 // pred_fallthru
        _
      %p1286 = scmp.le.s32.totalorder 2, %s28
      // Predicated region
      $region109: #{tpu_custom_call.1} parent=5 // pred_check
        %p1287 = pneg %p1286
      $region110: #{tpu_custom_call.1} parent=5 // pred_check_branch
        %1289 = sbr.rel (%p1287) target = $region112
      $region111: #{tpu_custom_call.1} parent=5 // pred_region
        %s1290 = ssub.s32 %s28, 2
        // Predicated region
        $region113: #{tpu_custom_call.1} parent=111 // pred_check
          %p1291 = pneg %p512
        $region114: #{tpu_custom_call.1} parent=111 // pred_check_branch
          %1293 = sbr.rel (%p1291) target = $region116
        $region115: #{tpu_custom_call.1} parent=111 // pred_region
          %s1294 = sand.u32 %s497, 1
          %s1295 = scalar_lea.sflag [#allocation5], %s1294
          %s1296 = sand.u32 %s497, 1
          %s1297 = smul.addr %s1296, 8
          %s1298 = scalar_lea.vmem [#allocation6], %s1297
          %1300 = dma.done %s1295, 128
        $region116: #{tpu_custom_call.1} parent=111 // pred_fallthru
          _
      $region112: #{tpu_custom_call.1} parent=5 // pred_fallthru
        _
    $region6: #{tpu_custom_call.1} parent=1 // loop_footer
      %s32 = sadd.s32 1, %s28
    $region7: #{tpu_custom_call.1} parent=1 // loop_footer_branch
      %27 = sbr.rel target = $region3
    $region8: #{tpu_custom_call.1} parent=1 // loop_exit
      _
    %1301 = vsyncpa [#allocation4], 1
    %s1302 = scalar_lea.sflag [#allocation4], 1
    %1303 = vsyncpa %s1302, 1
    %1304 = vsyncpa [#allocation5], 1
    %s1305 = scalar_lea.sflag [#allocation5], 1
    %1306 = vsyncpa %s1305, 1

</llo_original>
